<compile_context>
chip_gen: v7x
topology: tpu7x:2x2x1
jax: 0.10.0
libtpu: 0.0.40
codegen_flags: <defaults>
</compile_context>

<pallas_src>
import functools
import math

import jax
import jax.numpy as jnp
from jax.experimental import pallas as pl
from jax.experimental.pallas import tpu as pltpu


_NEG_INF = -1e30  # large finite negative: avoids exp(-inf)/NaN pathologies


def _make_mha_kernel(seq_len: int, embedding_dim: int, head_count: int, head_dim: int):
    H, S, E, D = head_count, seq_len, embedding_dim, head_dim

    def mha_kernel(q_ref, k_ref, v_ref,
                   wq_ref, bq_ref, wk_ref, bk_ref, wv_ref, bv_ref,
                   wo_ref, bo_ref, o_ref):
        # Blocks: q/k/v (1,S,E); wq/wk/wv (H,E,D); bq/bk/bv (H,1,D);
        #         wo (H,D,E); bo (1,E); out (1,S,E).
        xq = q_ref[0]          # (S, E)
        xk = k_ref[0]
        xv = v_ref[0]

        # Batched-over-heads matmul helper: (H,M,K) x (H,K,N) -> (H,M,N).
        bmm = functools.partial(
            jax.lax.dot_general,
            dimension_numbers=(((2,), (1,)), ((0,), (0,))),
            preferred_element_type=jnp.float32)

        # Projections for all heads at once (lane-dense, no per-head slicing).
        # The 1/sqrt(D) attention scale is already folded into wq/bq.
        xq_h = jnp.broadcast_to(xq[None], (H, S, E))
        xk_h = jnp.broadcast_to(xk[None], (H, S, E))
        xv_h = jnp.broadcast_to(xv[None], (H, S, E))
        Q = bmm(xq_h, wq_ref[...]) + bq_ref[...]     # (H, S, D), pre-scaled
        K = bmm(xk_h, wk_ref[...]) + bk_ref[...]     # (H, S, D)
        V = bmm(xv_h, wv_ref[...]) + bv_ref[...]     # (H, S, D)

        # scores[h] = Q[h] @ K[h]^T, contracting on D directly (no explicit .T).
        scores = jax.lax.dot_general(
            Q, K, dimension_numbers=(((2,), (2,)), ((0,), (0,))),
            preferred_element_type=jnp.float32)      # (H, S, S)

        # Causal (lower-triangular) mask, broadcast over heads.
        row = jax.lax.broadcasted_iota(jnp.int32, (S, S), 0)
        col = jax.lax.broadcasted_iota(jnp.int32, (S, S), 1)
        scores = jnp.where(row >= col, scores, _NEG_INF)

        # Row-wise softmax; normalization deferred until after p @ V so the
        # divide touches the (H,S,D) context (EUP reciprocal), not (H,S,S).
        m = jnp.max(scores, axis=-1, keepdims=True)
        p = jnp.exp(scores - m)
        l = jnp.sum(p, axis=-1, keepdims=True)       # (H, S, 1)

        ctx = bmm(p, V)                              # (H, S, D), unnormalized
        ctx = ctx * pl.reciprocal(l, approx=True)

        # Output projection folded per head: (H,S,D) x (H,D,E) summed over H.
        # Equivalent to concat(heads) @ Wo but with no concat and a single
        # lane-dense (S,E) write.
        out_h = bmm(ctx, wo_ref[...])                # (H, S, E)
        out = jnp.sum(out_h, axis=0) + bo_ref[...]   # (S, E)
        o_ref[0] = out.astype(o_ref.dtype)

    return mha_kernel


def multi_head_attention(q_seq, k_seq, v_seq, params, head_count):
    """params: dict with 'wq','bq','wk','bk','wv','bv','wo','bo'.
    Weights are (E, E) laid out as (in, out); biases are (1, E)."""
    batch, seq_len, embedding_dim = q_seq.shape
    assert embedding_dim % head_count == 0
    head_dim = embedding_dim // head_count
    H, S, E, D = head_count, seq_len, embedding_dim, head_dim
    scale = 1.0 / math.sqrt(head_dim)

    # Pre-split weights per head once, in plain XLA (free at trace time):
    #   wq/wk/wv: (E, E) -> (H, E, D)   [output dim split into heads]
    #   wo:       (E, E) -> (H, D, E)   [concat-head input dim split]
    # Fold the attention scale into the Q projection.
    def split_out(w):                          # (E, E) -> (H, E, D)
        return jnp.transpose(w.reshape(E, H, D), (1, 0, 2))

    wq_h = split_out(params["wq"]) * scale
    wk_h = split_out(params["wk"])
    wv_h = split_out(params["wv"])
    bq_h = params["bq"].reshape(H, 1, D) * scale
    bk_h = params["bk"].reshape(H, 1, D)
    bv_h = params["bv"].reshape(H, 1, D)
    wo_h = params["wo"].reshape(H, D, E)
    bo = params["bo"].reshape(1, E)

    kernel = _make_mha_kernel(S, E, H, D)

    seq_spec = pl.BlockSpec((1, S, E), lambda b: (b, 0, 0))
    wqkv_spec = pl.BlockSpec((H, E, D), lambda b: (0, 0, 0))
    bqkv_spec = pl.BlockSpec((H, 1, D), lambda b: (0, 0, 0))
    wo_spec = pl.BlockSpec((H, D, E), lambda b: (0, 0, 0))
    bo_spec = pl.BlockSpec((1, E), lambda b: (0, 0))

    return pl.pallas_call(
        kernel,
        out_shape=jax.ShapeDtypeStruct((batch, S, E), q_seq.dtype),
        grid_spec=pltpu.PrefetchScalarGridSpec(
            num_scalar_prefetch=0,
            grid=(batch,),
            in_specs=[
                seq_spec, seq_spec, seq_spec,
                wqkv_spec, bqkv_spec,   # Q
                wqkv_spec, bqkv_spec,   # K
                wqkv_spec, bqkv_spec,   # V
                wo_spec, bo_spec,       # output projection
            ],
            out_specs=seq_spec,
        ),
        compiler_params=pltpu.CompilerParams(
            dimension_semantics=("parallel",),
            # Raised above the scoped default; still well under v7x's 64 MiB
            # physical VMEM (weights are tiny here; at large E consider
            # single-buffering the constant-index weight specs).
            vmem_limit_bytes=48 * 1024 * 1024,
        ),
    )(q_seq, k_seq, v_seq,
      wq_h, bq_h, wk_h, bk_h, wv_h, bv_h, wo_h, bo)


def _reference_mha(q_seq, k_seq, v_seq, params, head_count):
    """Plain-JAX reference mirroring the PyTorch forward (for validation)."""
    B, S, E = q_seq.shape
    D = E // head_count

    def proj(x, w, b):
        return x @ w + b  # w already (in, out)

    Q = proj(q_seq, params["wq"], params["bq"]).reshape(B, S, head_count, D).transpose(0, 2, 1, 3)
    K = proj(k_seq, params["wk"], params["bk"]).reshape(B, S, head_count, D).transpose(0, 2, 1, 3)
    V = proj(v_seq, params["wv"], params["bv"]).reshape(B, S, head_count, D).transpose(0, 2, 1, 3)

    scores = jnp.einsum("bhqd,bhkd->bhqk", Q, K) / math.sqrt(D)
    mask = jnp.tril(jnp.ones((S, S), dtype=bool))
    scores = jnp.where(mask, scores, -jnp.inf)
    probs = jax.nn.softmax(scores, axis=-1)
    attn = jnp.einsum("bhqk,bhkd->bhqd", probs, V)
    attn = attn.transpose(0, 2, 1, 3).reshape(B, S, E)
    return attn @ params["wo"] + params["bo"]


if __name__ == "__main__":
    # Small shapes consistent with the module: batch=2, seq=8, embedding=32, heads=4.
    batch, seq_len, embedding_dim, head_count = 2, 8, 32, 4

    key = jax.random.PRNGKey(0)
    keys = jax.random.split(key, 12)
    bound = 1.0 / math.sqrt(embedding_dim)   # nn.Linear-style uniform init

    def init_w(k):
        return jax.random.uniform(k, (embedding_dim, embedding_dim),
                                  jnp.float32, -bound, bound)

    def init_b(k):
        return jax.random.uniform(k, (1, embedding_dim), jnp.float32, -bound, bound)

    params = {
        "wq": init_w(keys[0]), "bq": init_b(keys[1]),
        "wk": init_w(keys[2]), "bk": init_b(keys[3]),
        "wv": init_w(keys[4]), "bv": init_b(keys[5]),
        "wo": init_w(keys[6]), "bo": init_b(keys[7]),
    }

    q_seq = jax.random.normal(keys[8], (batch, seq_len, embedding_dim), jnp.float32)
    k_seq = jax.random.normal(keys[9], (batch, seq_len, embedding_dim), jnp.float32)
    v_seq = jax.random.normal(keys[10], (batch, seq_len, embedding_dim), jnp.float32)

    out = multi_head_attention(q_seq, k_seq, v_seq, params, head_count)
    out = jax.block_until_ready(out)

    ref = _reference_mha(q_seq, k_seq, v_seq, params, head_count)
    assert out.shape == (batch, seq_len, embedding_dim)
    # Tolerance accounts for the approximate (EUP) reciprocal in the softmax
    # normalization (~1e-4 relative); everything else accumulates in fp32.
    assert jnp.allclose(out, ref, atol=2e-3, rtol=2e-3), "mismatch vs reference"

    print("KERNEL_OK")
</pallas_src>

<mosaic_0001>
module attributes {stable_mosaic.version = 11 : i64} {
  func.func @mha_kernel(%arg0: i32, %arg1: memref<1x8x32xf32, #tpu.memory_space<vmem>>, %arg2: memref<1x8x32xf32, #tpu.memory_space<vmem>>, %arg3: memref<1x8x32xf32, #tpu.memory_space<vmem>>, %arg4: memref<4x32x8xf32, #tpu.memory_space<vmem>>, %arg5: memref<4x1x8xf32, #tpu.memory_space<vmem>>, %arg6: memref<4x32x8xf32, #tpu.memory_space<vmem>>, %arg7: memref<4x1x8xf32, #tpu.memory_space<vmem>>, %arg8: memref<4x32x8xf32, #tpu.memory_space<vmem>>, %arg9: memref<4x1x8xf32, #tpu.memory_space<vmem>>, %arg10: memref<4x8x32xf32, #tpu.memory_space<vmem>>, %arg11: memref<1x32xf32, #tpu.memory_space<vmem>>, %arg12: memref<1x8x32xf32, #tpu.memory_space<vmem>>) attributes {dimension_semantics = [#tpu.dimension_semantics<parallel>], iteration_bounds = array<i64: 2>, scalar_prefetch = 0 : i64, scratch_operands = 0 : i64, tpu.core_type = #tpu.core_type<tc>, window_params = [{transform_indices = @transform_0, window_bounds = array<i64: 1, 8, 32>}, {transform_indices = @transform_1, window_bounds = array<i64: 1, 8, 32>}, {transform_indices = @transform_2, window_bounds = array<i64: 1, 8, 32>}, {pipeline_mode = #tpu.pipeline_mode<synchronous>, transform_indices = @transform_3, window_bounds = array<i64: 4, 32, 8>}, {pipeline_mode = #tpu.pipeline_mode<synchronous>, transform_indices = @transform_4, window_bounds = array<i64: 4, 1, 8>}, {pipeline_mode = #tpu.pipeline_mode<synchronous>, transform_indices = @transform_5, window_bounds = array<i64: 4, 32, 8>}, {pipeline_mode = #tpu.pipeline_mode<synchronous>, transform_indices = @transform_6, window_bounds = array<i64: 4, 1, 8>}, {pipeline_mode = #tpu.pipeline_mode<synchronous>, transform_indices = @transform_7, window_bounds = array<i64: 4, 32, 8>}, {pipeline_mode = #tpu.pipeline_mode<synchronous>, transform_indices = @transform_8, window_bounds = array<i64: 4, 1, 8>}, {pipeline_mode = #tpu.pipeline_mode<synchronous>, transform_indices = @transform_9, window_bounds = array<i64: 4, 8, 32>}, {pipeline_mode = #tpu.pipeline_mode<synchronous>, transform_indices = @transform_10, window_bounds = array<i64: 1, 32>}, {transform_indices = @transform_11, window_bounds = array<i64: 1, 8, 32>}]} {
    %c0 = arith.constant 0 : index
    %c0_0 = arith.constant 0 : index
    %c0_1 = arith.constant 0 : index
    %0 = vector.load %arg1[%c0, %c0_0, %c0_1] : memref<1x8x32xf32, #tpu.memory_space<vmem>>, vector<1x8x32xf32>
    %1 = vector.shape_cast %0 : vector<1x8x32xf32> to vector<8x32xf32>
    %c0_2 = arith.constant 0 : index
    %c0_3 = arith.constant 0 : index
    %c0_4 = arith.constant 0 : index
    %2 = vector.load %arg2[%c0_2, %c0_3, %c0_4] : memref<1x8x32xf32, #tpu.memory_space<vmem>>, vector<1x8x32xf32>
    %3 = vector.shape_cast %2 : vector<1x8x32xf32> to vector<8x32xf32>
    %c0_5 = arith.constant 0 : index
    %c0_6 = arith.constant 0 : index
    %c0_7 = arith.constant 0 : index
    %4 = vector.load %arg3[%c0_5, %c0_6, %c0_7] : memref<1x8x32xf32, #tpu.memory_space<vmem>>, vector<1x8x32xf32>
    %5 = vector.shape_cast %4 : vector<1x8x32xf32> to vector<8x32xf32>
    %6 = vector.shape_cast %1 : vector<8x32xf32> to vector<1x8x32xf32>
    %7 = vector.shape_cast %6 : vector<1x8x32xf32> to vector<1x8x32xf32>
    %8 = vector.broadcast %7 : vector<1x8x32xf32> to vector<4x8x32xf32>
    %9 = vector.shape_cast %3 : vector<8x32xf32> to vector<1x8x32xf32>
    %10 = vector.shape_cast %9 : vector<1x8x32xf32> to vector<1x8x32xf32>
    %11 = vector.broadcast %10 : vector<1x8x32xf32> to vector<4x8x32xf32>
    %12 = vector.shape_cast %5 : vector<8x32xf32> to vector<1x8x32xf32>
    %13 = vector.shape_cast %12 : vector<1x8x32xf32> to vector<1x8x32xf32>
    %14 = vector.broadcast %13 : vector<1x8x32xf32> to vector<4x8x32xf32>
    %c0_8 = arith.constant 0 : index
    %c0_9 = arith.constant 0 : index
    %c0_10 = arith.constant 0 : index
    %15 = vector.load %arg4[%c0_8, %c0_9, %c0_10] : memref<4x32x8xf32, #tpu.memory_space<vmem>>, vector<4x32x8xf32>
    %cst = arith.constant dense<0.000000e+00> : vector<4x8x8xf32>
    %16 = tpu.matmul %8, %15, %cst {dimension_numbers = #tpu.dot_dimension_numbers<[2], [1], [1], [2], [0, 0, 0, 1, 1, 2], [0], [0]>} : vector<4x8x32xf32>, vector<4x32x8xf32>, vector<4x8x8xf32> -> vector<4x8x8xf32>
    %c0_11 = arith.constant 0 : index
    %c0_12 = arith.constant 0 : index
    %c0_13 = arith.constant 0 : index
    %17 = vector.load %arg5[%c0_11, %c0_12, %c0_13] : memref<4x1x8xf32, #tpu.memory_space<vmem>>, vector<4x1x8xf32>
    %18 = vector.broadcast %17 : vector<4x1x8xf32> to vector<4x8x8xf32>
    %19 = arith.addf %16, %18 : vector<4x8x8xf32>
    %c0_14 = arith.constant 0 : index
    %c0_15 = arith.constant 0 : index
    %c0_16 = arith.constant 0 : index
    %20 = vector.load %arg6[%c0_14, %c0_15, %c0_16] : memref<4x32x8xf32, #tpu.memory_space<vmem>>, vector<4x32x8xf32>
    %cst_17 = arith.constant dense<0.000000e+00> : vector<4x8x8xf32>
    %21 = tpu.matmul %11, %20, %cst_17 {dimension_numbers = #tpu.dot_dimension_numbers<[2], [1], [1], [2], [0, 0, 0, 1, 1, 2], [0], [0]>} : vector<4x8x32xf32>, vector<4x32x8xf32>, vector<4x8x8xf32> -> vector<4x8x8xf32>
    %c0_18 = arith.constant 0 : index
    %c0_19 = arith.constant 0 : index
    %c0_20 = arith.constant 0 : index
    %22 = vector.load %arg7[%c0_18, %c0_19, %c0_20] : memref<4x1x8xf32, #tpu.memory_space<vmem>>, vector<4x1x8xf32>
    %23 = vector.broadcast %22 : vector<4x1x8xf32> to vector<4x8x8xf32>
    %24 = arith.addf %21, %23 : vector<4x8x8xf32>
    %c0_21 = arith.constant 0 : index
    %c0_22 = arith.constant 0 : index
    %c0_23 = arith.constant 0 : index
    %25 = vector.load %arg8[%c0_21, %c0_22, %c0_23] : memref<4x32x8xf32, #tpu.memory_space<vmem>>, vector<4x32x8xf32>
    %cst_24 = arith.constant dense<0.000000e+00> : vector<4x8x8xf32>
    %26 = tpu.matmul %14, %25, %cst_24 {dimension_numbers = #tpu.dot_dimension_numbers<[2], [1], [1], [2], [0, 0, 0, 1, 1, 2], [0], [0]>} : vector<4x8x32xf32>, vector<4x32x8xf32>, vector<4x8x8xf32> -> vector<4x8x8xf32>
    %c0_25 = arith.constant 0 : index
    %c0_26 = arith.constant 0 : index
    %c0_27 = arith.constant 0 : index
    %27 = vector.load %arg9[%c0_25, %c0_26, %c0_27] : memref<4x1x8xf32, #tpu.memory_space<vmem>>, vector<4x1x8xf32>
    %28 = vector.broadcast %27 : vector<4x1x8xf32> to vector<4x8x8xf32>
    %29 = arith.addf %26, %28 : vector<4x8x8xf32>
    %cst_28 = arith.constant dense<0.000000e+00> : vector<4x8x8xf32>
    %30 = tpu.matmul %19, %24, %cst_28 {dimension_numbers = #tpu.dot_dimension_numbers<[2], [2], [1], [1], [0, 0, 0, 1, 1, 1], [0], [0]>} : vector<4x8x8xf32>, vector<4x8x8xf32>, vector<4x8x8xf32> -> vector<4x8x8xf32>
    %31 = tpu.iota {dimensions = array<i32: 0>} : vector<8x8xi32>
    %32 = tpu.iota {dimensions = array<i32: 1>} : vector<8x8xi32>
    %33 = arith.cmpi sge, %31, %32 : vector<8x8xi32>
    %cst_29 = arith.constant -1.000000e+30 : f32
    %34 = vector.shape_cast %33 : vector<8x8xi1> to vector<1x8x8xi1>
    %35 = vector.broadcast %34 : vector<1x8x8xi1> to vector<4x8x8xi1>
    %36 = vector.broadcast %cst_29 : f32 to vector<4x8x8xf32>
    %37 = arith.select %35, %30, %36 : vector<4x8x8xi1>, vector<4x8x8xf32>
    %cst_30 = arith.constant dense<0xFF800000> : vector<4x8xf32>
    %38 = vector.multi_reduction <maximumf>, %37, %cst_30 [2] : vector<4x8x8xf32> to vector<4x8xf32>
    %39 = vector.shape_cast %38 : vector<4x8xf32> to vector<4x8x1xf32>
    %40 = vector.broadcast %39 : vector<4x8x1xf32> to vector<4x8x8xf32>
    %41 = arith.subf %37, %40 : vector<4x8x8xf32>
    %42 = math.exp %41 : vector<4x8x8xf32>
    %cst_31 = arith.constant dense<0.000000e+00> : vector<4x8xf32>
    %43 = vector.multi_reduction <add>, %42, %cst_31 [2] : vector<4x8x8xf32> to vector<4x8xf32>
    %44 = vector.shape_cast %43 : vector<4x8xf32> to vector<4x8x1xf32>
    %cst_32 = arith.constant dense<0.000000e+00> : vector<4x8x8xf32>
    %45 = tpu.matmul %42, %29, %cst_32 {dimension_numbers = #tpu.dot_dimension_numbers<[2], [1], [1], [2], [0, 0, 0, 1, 1, 2], [0], [0]>} : vector<4x8x8xf32>, vector<4x8x8xf32>, vector<4x8x8xf32> -> vector<4x8x8xf32>
    %46 = tpu.reciprocal %44 {approx = true} : vector<4x8x1xf32> -> vector<4x8x1xf32>
    %47 = vector.broadcast %46 : vector<4x8x1xf32> to vector<4x8x8xf32>
    %48 = arith.mulf %45, %47 : vector<4x8x8xf32>
    %c0_33 = arith.constant 0 : index
    %c0_34 = arith.constant 0 : index
    %c0_35 = arith.constant 0 : index
    %49 = vector.load %arg10[%c0_33, %c0_34, %c0_35] : memref<4x8x32xf32, #tpu.memory_space<vmem>>, vector<4x8x32xf32>
    %cst_36 = arith.constant dense<0.000000e+00> : vector<4x8x32xf32>
    %50 = tpu.matmul %48, %49, %cst_36 {dimension_numbers = #tpu.dot_dimension_numbers<[2], [1], [1], [2], [0, 0, 0, 1, 1, 2], [0], [0]>} : vector<4x8x8xf32>, vector<4x8x32xf32>, vector<4x8x32xf32> -> vector<4x8x32xf32>
    %cst_37 = arith.constant dense<0.000000e+00> : vector<8x32xf32>
    %51 = vector.multi_reduction <add>, %50, %cst_37 [0] : vector<4x8x32xf32> to vector<8x32xf32>
    %c0_38 = arith.constant 0 : index
    %c0_39 = arith.constant 0 : index
    %52 = vector.load %arg11[%c0_38, %c0_39] : memref<1x32xf32, #tpu.memory_space<vmem>>, vector<1x32xf32>
    %53 = vector.broadcast %52 : vector<1x32xf32> to vector<8x32xf32>
    %54 = arith.addf %51, %53 : vector<8x32xf32>
    %c0_40 = arith.constant 0 : index
    %c0_41 = arith.constant 0 : index
    %c0_42 = arith.constant 0 : index
    %55 = vector.load %arg12[%c0_40, %c0_41, %c0_42] : memref<1x8x32xf32, #tpu.memory_space<vmem>>, vector<1x8x32xf32>
    %56 = vector.shape_cast %55 : vector<1x8x32xf32> to vector<8x32xf32>
    %57 = vector.shape_cast %54 : vector<8x32xf32> to vector<1x8x32xf32>
    tpu.vector_store %arg12[%c0_40, %c0_41, %c0_42], %57 {strides = array<i32>} : memref<1x8x32xf32, #tpu.memory_space<vmem>>, vector<1x8x32xf32>,
    return
  }
  func.func @transform_0(%arg0: i32) -> (i32, i32, i32) {
    %c0_i32 = arith.constant 0 : i32
    %c0_i32_0 = arith.constant 0 : i32
    %c0_i32_1 = arith.constant 0 : i32
    return %arg0, %c0_i32, %c0_i32_0 : i32, i32, i32
  }
  func.func @transform_1(%arg0: i32) -> (i32, i32, i32) {
    %c0_i32 = arith.constant 0 : i32
    %c0_i32_0 = arith.constant 0 : i32
    %c0_i32_1 = arith.constant 0 : i32
    return %arg0, %c0_i32, %c0_i32_0 : i32, i32, i32
  }
  func.func @transform_2(%arg0: i32) -> (i32, i32, i32) {
    %c0_i32 = arith.constant 0 : i32
    %c0_i32_0 = arith.constant 0 : i32
    %c0_i32_1 = arith.constant 0 : i32
    return %arg0, %c0_i32, %c0_i32_0 : i32, i32, i32
  }
  func.func @transform_3(%arg0: i32) -> (i32, i32, i32) {
    %c0_i32 = arith.constant 0 : i32
    %c0_i32_0 = arith.constant 0 : i32
    %c0_i32_1 = arith.constant 0 : i32
    %c0_i32_2 = arith.constant 0 : i32
    return %c0_i32, %c0_i32_0, %c0_i32_1 : i32, i32, i32
  }
  func.func @transform_4(%arg0: i32) -> (i32, i32, i32) {
    %c0_i32 = arith.constant 0 : i32
    %c0_i32_0 = arith.constant 0 : i32
    %c0_i32_1 = arith.constant 0 : i32
    %c0_i32_2 = arith.constant 0 : i32
    return %c0_i32, %c0_i32_0, %c0_i32_1 : i32, i32, i32
  }
  func.func @transform_5(%arg0: i32) -> (i32, i32, i32) {
    %c0_i32 = arith.constant 0 : i32
    %c0_i32_0 = arith.constant 0 : i32
    %c0_i32_1 = arith.constant 0 : i32
    %c0_i32_2 = arith.constant 0 : i32
    return %c0_i32, %c0_i32_0, %c0_i32_1 : i32, i32, i32
  }
  func.func @transform_6(%arg0: i32) -> (i32, i32, i32) {
    %c0_i32 = arith.constant 0 : i32
    %c0_i32_0 = arith.constant 0 : i32
    %c0_i32_1 = arith.constant 0 : i32
    %c0_i32_2 = arith.constant 0 : i32
    return %c0_i32, %c0_i32_0, %c0_i32_1 : i32, i32, i32
  }
  func.func @transform_7(%arg0: i32) -> (i32, i32, i32) {
    %c0_i32 = arith.constant 0 : i32
    %c0_i32_0 = arith.constant 0 : i32
    %c0_i32_1 = arith.constant 0 : i32
    %c0_i32_2 = arith.constant 0 : i32
    return %c0_i32, %c0_i32_0, %c0_i32_1 : i32, i32, i32
  }
  func.func @transform_8(%arg0: i32) -> (i32, i32, i32) {
    %c0_i32 = arith.constant 0 : i32
    %c0_i32_0 = arith.constant 0 : i32
    %c0_i32_1 = arith.constant 0 : i32
    %c0_i32_2 = arith.constant 0 : i32
    return %c0_i32, %c0_i32_0, %c0_i32_1 : i32, i32, i32
  }
  func.func @transform_9(%arg0: i32) -> (i32, i32, i32) {
    %c0_i32 = arith.constant 0 : i32
    %c0_i32_0 = arith.constant 0 : i32
    %c0_i32_1 = arith.constant 0 : i32
    %c0_i32_2 = arith.constant 0 : i32
    return %c0_i32, %c0_i32_0, %c0_i32_1 : i32, i32, i32
  }
  func.func @transform_10(%arg0: i32) -> (i32, i32) {
    %c0_i32 = arith.constant 0 : i32
    %c0_i32_0 = arith.constant 0 : i32
    %c0_i32_1 = arith.constant 0 : i32
    return %c0_i32, %c0_i32_0 : i32, i32
  }
  func.func @transform_11(%arg0: i32) -> (i32, i32, i32) {
    %c0_i32 = arith.constant 0 : i32
    %c0_i32_0 = arith.constant 0 : i32
    %c0_i32_1 = arith.constant 0 : i32
    return %arg0, %c0_i32, %c0_i32_0 : i32, i32, i32
  }
}

</mosaic_0001>

<llo_original>
// kernel: tpu_custom_call.1
$region0: #{tpu_custom_call.1}
  #allocation0 [shape = 'u32[]', space=smem, size = 0x4, offset = 0x4, fixed_abs, tag = 'smem constant byte address 0x4 - core index']
  #allocation1 [shape = 'u32[144,128]{1,0:T(1,128)}', space=vmem, size = 0x12000, scoped, tag = 'internal scratch']
  %s0 = inlined_call_operand.vmem [shape: f32[2,8,32], index: 0, kind: input, shape index: {}]
  %s1 = inlined_call_operand.vmem [shape: f32[2,8,32], index: 1, kind: input, shape index: {}]
  %s2 = inlined_call_operand.vmem [shape: f32[2,8,32], index: 2, kind: input, shape index: {}]
  %s3 = inlined_call_operand.vmem [shape: f32[4,32,8], index: 3, kind: input, shape index: {}]
  %s4 = inlined_call_operand.vmem [shape: f32[4,1,8], index: 4, kind: input, shape index: {}]
  %s5 = inlined_call_operand.vmem [shape: f32[4,32,8], index: 5, kind: input, shape index: {}]
  %s6 = inlined_call_operand.vmem [shape: f32[4,1,8], index: 6, kind: input, shape index: {}]
  %s7 = inlined_call_operand.vmem [shape: f32[4,32,8], index: 7, kind: input, shape index: {}]
  %s8 = inlined_call_operand.vmem [shape: f32[4,1,8], index: 8, kind: input, shape index: {}]
  %s9 = inlined_call_operand.vmem [shape: f32[4,8,32], index: 9, kind: input, shape index: {}]
  %s10 = inlined_call_operand.vmem [shape: f32[1,32], index: 10, kind: input, shape index: {}]
  %s11 = inlined_call_operand.hbm [shape: f32[2,8,32], index: 11, kind: output, shape index: {}]
  %s12 = sld [smem:[#allocation0]]
  $region77: #{tpu_custom_call.1} parent=0
    _
  %s14 = ssub.s32 1, %s12
  %s15 = scalar_select 0, %s14, %s12
  $region1: #{tpu_custom_call.1} parent=0
    #allocation2 [shape = 'u8[8192]{0}', space=vmem, size = 0x2000, scoped, tag = 'output window, operand 0']
    #allocation3 [shape = 's32[2]{0}', space=sflag, size = 0x8, scoped, tag = 'scoped memory for tpu_custom_call.1']
    %16 = vsyncpa [#allocation3], 0
    %s17 = scalar_lea.sflag [#allocation3], 1
    %18 = vsyncpa %s17, 0
    loop: start=0, step=1, limit=4
    $region2: #{tpu_custom_call.1} parent=1 // loop_pre_header
      _
    $region3: #{tpu_custom_call.1} parent=1 // loop_header
      %s20 = sphi 0, %s24
      %p21 = scmp.ge.s32.totalorder %s20, 4
      %s30 = sphi 0, %s32
      %s33 = sphi 0, %s30
      %s34 = sphi 0, %s33
      %s50 = sphi 0, %s34
      %s56 = sphi 0, %s58
      %s59 = sphi 0, %s56
      %s60 = sphi 0, %s59
      %s76 = sphi 0, %s60
      %s82 = sphi 0, %s84
      %s85 = sphi 0, %s82
      %s86 = sphi 0, %s85
      %s102 = sphi 0, %s86
      %s106 = sphi 0, %s106
      %s108 = sphi 0, %s106
      %s109 = sphi 0, %s108
      %s123 = sphi 0, %s109
      %s127 = sphi 0, %s127
      %s129 = sphi 0, %s127
      %s130 = sphi 0, %s129
      %s144 = sphi 0, %s130
      %s148 = sphi 0, %s148
      %s150 = sphi 0, %s148
      %s151 = sphi 0, %s150
      %s165 = sphi 0, %s151
      %s169 = sphi 0, %s169
      %s171 = sphi 0, %s169
      %s172 = sphi 0, %s171
      %s186 = sphi 0, %s172
      %s190 = sphi 0, %s190
      %s192 = sphi 0, %s190
      %s193 = sphi 0, %s192
      %s207 = sphi 0, %s193
      %s211 = sphi 0, %s211
      %s213 = sphi 0, %s211
      %s214 = sphi 0, %s213
      %s228 = sphi 0, %s214
      %s232 = sphi 0, %s232
      %s234 = sphi 0, %s232
      %s235 = sphi 0, %s234
      %s249 = sphi 0, %s235
      %s253 = sphi 0, %s253
      %s255 = sphi 0, %s253
      %s256 = sphi 0, %s255
      %s270 = sphi 0, %s256
      %s276 = sphi 0, %s278
      %s279 = sphi 0, %s276
      %s280 = sphi 0, %s279
      %s296 = sphi 0, %s280
    $region4: #{tpu_custom_call.1} parent=1 // loop_header_branch
      %23 = sbr.rel (%p21) target = $region8
    $region5: #{tpu_custom_call.1} parent=1 // loop_body
      %s25 = ssub.s32 %s20, 1
      %s26 = ssub.s32 %s20, 2
      %s27 = sadd.s32 %s20, 1
      %s28 = ssub.s32 %s20, %s27
      %p29 = scmp.eq.s32.totalorder %s28, 0
      %s31 = sadd.s32 %s30, 1
      %s32 = scalar_select %p29, %s30, %s31
      %p35 = pneg %p29
      %p36 = scmp.eq.s32.totalorder %s20, 1
      %p37 = por %p35, %p36
      %p38 = scmp.ne.s32.totalorder %s30, %s33
      %p39 = scmp.eq.s32.totalorder %s20, 0
      %p40 = por %p38, %p39
      %p41 = scmp.ne.s32.totalorder %s30, %s33
      %p42 = scmp.eq.s32.totalorder %s25, 1
      %p43 = por %p41, %p42
      %p44 = scmp.ne.s32.totalorder %s33, %s34
      %p45 = scmp.eq.s32.totalorder %s25, 0
      %p46 = por %p44, %p45
      %p47 = scmp.ne.s32.totalorder %s33, %s34
      %p48 = scmp.eq.s32.totalorder %s26, 1
      %p49 = por %p47, %p48
      %p51 = scmp.ne.s32.totalorder %s34, %s50
      %p52 = scmp.eq.s32.totalorder %s26, 0
      %p53 = por %p51, %p52
      %s54 = ssub.s32 %s20, %s27
      %p55 = scmp.eq.s32.totalorder %s54, 0
      %s57 = sadd.s32 %s56, 1
      %s58 = scalar_select %p55, %s56, %s57
      %p61 = pneg %p55
      %p62 = scmp.eq.s32.totalorder %s20, 1
      %p63 = por %p61, %p62
      %p64 = scmp.ne.s32.totalorder %s56, %s59
      %p65 = scmp.eq.s32.totalorder %s20, 0
      %p66 = por %p64, %p65
      %p67 = scmp.ne.s32.totalorder %s56, %s59
      %p68 = scmp.eq.s32.totalorder %s25, 1
      %p69 = por %p67, %p68
      %p70 = scmp.ne.s32.totalorder %s59, %s60
      %p71 = scmp.eq.s32.totalorder %s25, 0
      %p72 = por %p70, %p71
      %p73 = scmp.ne.s32.totalorder %s59, %s60
      %p74 = scmp.eq.s32.totalorder %s26, 1
      %p75 = por %p73, %p74
      %p77 = scmp.ne.s32.totalorder %s60, %s76
      %p78 = scmp.eq.s32.totalorder %s26, 0
      %p79 = por %p77, %p78
      %s80 = ssub.s32 %s20, %s27
      %p81 = scmp.eq.s32.totalorder %s80, 0
      %s83 = sadd.s32 %s82, 1
      %s84 = scalar_select %p81, %s82, %s83
      %p87 = pneg %p81
      %p88 = scmp.eq.s32.totalorder %s20, 1
      %p89 = por %p87, %p88
      %p90 = scmp.ne.s32.totalorder %s82, %s85
      %p91 = scmp.eq.s32.totalorder %s20, 0
      %p92 = por %p90, %p91
      %p93 = scmp.ne.s32.totalorder %s82, %s85
      %p94 = scmp.eq.s32.totalorder %s25, 1
      %p95 = por %p93, %p94
      %p96 = scmp.ne.s32.totalorder %s85, %s86
      %p97 = scmp.eq.s32.totalorder %s25, 0
      %p98 = por %p96, %p97
      %p99 = scmp.ne.s32.totalorder %s85, %s86
      %p100 = scmp.eq.s32.totalorder %s26, 1
      %p101 = por %p99, %p100
      %p103 = scmp.ne.s32.totalorder %s86, %s102
      %p104 = scmp.eq.s32.totalorder %s26, 0
      %p105 = por %p103, %p104
      %s107 = sadd.s32 %s106, 1
      %p110 = scmp.eq.s32.totalorder %s20, 1
      %p111 = scmp.ne.s32.totalorder %s106, %s108
      %p112 = scmp.eq.s32.totalorder %s20, 0
      %p113 = por %p111, %p112
      %p114 = scmp.ne.s32.totalorder %s106, %s108
      %p115 = scmp.eq.s32.totalorder %s25, 1
      %p116 = por %p114, %p115
      %p117 = scmp.ne.s32.totalorder %s108, %s109
      %p118 = scmp.eq.s32.totalorder %s25, 0
      %p119 = por %p117, %p118
      %p120 = scmp.ne.s32.totalorder %s108, %s109
      %p121 = scmp.eq.s32.totalorder %s26, 1
      %p122 = por %p120, %p121
      %p124 = scmp.ne.s32.totalorder %s109, %s123
      %p125 = scmp.eq.s32.totalorder %s26, 0
      %p126 = por %p124, %p125
      %s128 = sadd.s32 %s127, 1
      %p131 = scmp.eq.s32.totalorder %s20, 1
      %p132 = scmp.ne.s32.totalorder %s127, %s129
      %p133 = scmp.eq.s32.totalorder %s20, 0
      %p134 = por %p132, %p133
      %p135 = scmp.ne.s32.totalorder %s127, %s129
      %p136 = scmp.eq.s32.totalorder %s25, 1
      %p137 = por %p135, %p136
      %p138 = scmp.ne.s32.totalorder %s129, %s130
      %p139 = scmp.eq.s32.totalorder %s25, 0
      %p140 = por %p138, %p139
      %p141 = scmp.ne.s32.totalorder %s129, %s130
      %p142 = scmp.eq.s32.totalorder %s26, 1
      %p143 = por %p141, %p142
      %p145 = scmp.ne.s32.totalorder %s130, %s144
      %p146 = scmp.eq.s32.totalorder %s26, 0
      %p147 = por %p145, %p146
      %s149 = sadd.s32 %s148, 1
      %p152 = scmp.eq.s32.totalorder %s20, 1
      %p153 = scmp.ne.s32.totalorder %s148, %s150
      %p154 = scmp.eq.s32.totalorder %s20, 0
      %p155 = por %p153, %p154
      %p156 = scmp.ne.s32.totalorder %s148, %s150
      %p157 = scmp.eq.s32.totalorder %s25, 1
      %p158 = por %p156, %p157
      %p159 = scmp.ne.s32.totalorder %s150, %s151
      %p160 = scmp.eq.s32.totalorder %s25, 0
      %p161 = por %p159, %p160
      %p162 = scmp.ne.s32.totalorder %s150, %s151
      %p163 = scmp.eq.s32.totalorder %s26, 1
      %p164 = por %p162, %p163
      %p166 = scmp.ne.s32.totalorder %s151, %s165
      %p167 = scmp.eq.s32.totalorder %s26, 0
      %p168 = por %p166, %p167
      %s170 = sadd.s32 %s169, 1
      %p173 = scmp.eq.s32.totalorder %s20, 1
      %p174 = scmp.ne.s32.totalorder %s169, %s171
      %p175 = scmp.eq.s32.totalorder %s20, 0
      %p176 = por %p174, %p175
      %p177 = scmp.ne.s32.totalorder %s169, %s171
      %p178 = scmp.eq.s32.totalorder %s25, 1
      %p179 = por %p177, %p178
      %p180 = scmp.ne.s32.totalorder %s171, %s172
      %p181 = scmp.eq.s32.totalorder %s25, 0
      %p182 = por %p180, %p181
      %p183 = scmp.ne.s32.totalorder %s171, %s172
      %p184 = scmp.eq.s32.totalorder %s26, 1
      %p185 = por %p183, %p184
      %p187 = scmp.ne.s32.totalorder %s172, %s186
      %p188 = scmp.eq.s32.totalorder %s26, 0
      %p189 = por %p187, %p188
      %s191 = sadd.s32 %s190, 1
      %p194 = scmp.eq.s32.totalorder %s20, 1
      %p195 = scmp.ne.s32.totalorder %s190, %s192
      %p196 = scmp.eq.s32.totalorder %s20, 0
      %p197 = por %p195, %p196
      %p198 = scmp.ne.s32.totalorder %s190, %s192
      %p199 = scmp.eq.s32.totalorder %s25, 1
      %p200 = por %p198, %p199
      %p201 = scmp.ne.s32.totalorder %s192, %s193
      %p202 = scmp.eq.s32.totalorder %s25, 0
      %p203 = por %p201, %p202
      %p204 = scmp.ne.s32.totalorder %s192, %s193
      %p205 = scmp.eq.s32.totalorder %s26, 1
      %p206 = por %p204, %p205
      %p208 = scmp.ne.s32.totalorder %s193, %s207
      %p209 = scmp.eq.s32.totalorder %s26, 0
      %p210 = por %p208, %p209
      %s212 = sadd.s32 %s211, 1
      %p215 = scmp.eq.s32.totalorder %s20, 1
      %p216 = scmp.ne.s32.totalorder %s211, %s213
      %p217 = scmp.eq.s32.totalorder %s20, 0
      %p218 = por %p216, %p217
      %p219 = scmp.ne.s32.totalorder %s211, %s213
      %p220 = scmp.eq.s32.totalorder %s25, 1
      %p221 = por %p219, %p220
      %p222 = scmp.ne.s32.totalorder %s213, %s214
      %p223 = scmp.eq.s32.totalorder %s25, 0
      %p224 = por %p222, %p223
      %p225 = scmp.ne.s32.totalorder %s213, %s214
      %p226 = scmp.eq.s32.totalorder %s26, 1
      %p227 = por %p225, %p226
      %p229 = scmp.ne.s32.totalorder %s214, %s228
      %p230 = scmp.eq.s32.totalorder %s26, 0
      %p231 = por %p229, %p230
      %s233 = sadd.s32 %s232, 1
      %p236 = scmp.eq.s32.totalorder %s20, 1
      %p237 = scmp.ne.s32.totalorder %s232, %s234
      %p238 = scmp.eq.s32.totalorder %s20, 0
      %p239 = por %p237, %p238
      %p240 = scmp.ne.s32.totalorder %s232, %s234
      %p241 = scmp.eq.s32.totalorder %s25, 1
      %p242 = por %p240, %p241
      %p243 = scmp.ne.s32.totalorder %s234, %s235
      %p244 = scmp.eq.s32.totalorder %s25, 0
      %p245 = por %p243, %p244
      %p246 = scmp.ne.s32.totalorder %s234, %s235
      %p247 = scmp.eq.s32.totalorder %s26, 1
      %p248 = por %p246, %p247
      %p250 = scmp.ne.s32.totalorder %s235, %s249
      %p251 = scmp.eq.s32.totalorder %s26, 0
      %p252 = por %p250, %p251
      %s254 = sadd.s32 %s253, 1
      %p257 = scmp.eq.s32.totalorder %s20, 1
      %p258 = scmp.ne.s32.totalorder %s253, %s255
      %p259 = scmp.eq.s32.totalorder %s20, 0
      %p260 = por %p258, %p259
      %p261 = scmp.ne.s32.totalorder %s253, %s255
      %p262 = scmp.eq.s32.totalorder %s25, 1
      %p263 = por %p261, %p262
      %p264 = scmp.ne.s32.totalorder %s255, %s256
      %p265 = scmp.eq.s32.totalorder %s25, 0
      %p266 = por %p264, %p265
      %p267 = scmp.ne.s32.totalorder %s255, %s256
      %p268 = scmp.eq.s32.totalorder %s26, 1
      %p269 = por %p267, %p268
      %p271 = scmp.ne.s32.totalorder %s256, %s270
      %p272 = scmp.eq.s32.totalorder %s26, 0
      %p273 = por %p271, %p272
      %s274 = ssub.s32 %s20, %s27
      %p275 = scmp.eq.s32.totalorder %s274, 0
      %s277 = sadd.s32 %s276, 1
      %s278 = scalar_select %p275, %s276, %s277
      %p281 = pneg %p275
      %p282 = scmp.eq.s32.totalorder %s20, 1
      %p283 = por %p281, %p282
      %p284 = scmp.ne.s32.totalorder %s276, %s279
      %p285 = scmp.eq.s32.totalorder %s20, 0
      %p286 = por %p284, %p285
      %p287 = scmp.ne.s32.totalorder %s276, %s279
      %p288 = scmp.eq.s32.totalorder %s25, 1
      %p289 = por %p287, %p288
      %p290 = scmp.ne.s32.totalorder %s279, %s280
      %p291 = scmp.eq.s32.totalorder %s25, 0
      %p292 = por %p290, %p291
      %p293 = scmp.ne.s32.totalorder %s279, %s280
      %p294 = scmp.eq.s32.totalorder %s26, 1
      %p295 = por %p293, %p294
      %p297 = scmp.ne.s32.totalorder %s280, %s296
      %p298 = scmp.eq.s32.totalorder %s26, 0
      %p299 = por %p297, %p298
      %p300 = scmp.le.s32.totalorder 1, %s20
      %p301 = scmp.lt.s32.totalorder %s20, 3
      %p302 = pnand %p300, %p301
      %p303 = pneg %p302
      // Predicated region
      $region9: #{tpu_custom_call.1} parent=5 // pred_check
        _
      $region10: #{tpu_custom_call.1} parent=5 // pred_check_branch
        %305 = sbr.rel (%p302) target = $region12
      $region11: #{tpu_custom_call.1} parent=5 // pred_region
        %s306 = ssub.s32 %s20, 1
        // Predicated region
        $region13: #{tpu_custom_call.1} parent=11 // pred_check
          %p307 = pneg %p119
        $region14: #{tpu_custom_call.1} parent=11 // pred_check_branch
          %309 = sbr.rel (%p307) target = $region16
        $region15: #{tpu_custom_call.1} parent=11 // pred_region
          _
        $region16: #{tpu_custom_call.1} parent=11 // pred_fallthru
          _
        // Predicated region
        $region17: #{tpu_custom_call.1} parent=11 // pred_check
          %p310 = pneg %p140
        $region18: #{tpu_custom_call.1} parent=11 // pred_check_branch
          %312 = sbr.rel (%p310) target = $region20
        $region19: #{tpu_custom_call.1} parent=11 // pred_region
          _
        $region20: #{tpu_custom_call.1} parent=11 // pred_fallthru
          _
        // Predicated region
        $region21: #{tpu_custom_call.1} parent=11 // pred_check
          %p313 = pneg %p161
        $region22: #{tpu_custom_call.1} parent=11 // pred_check_branch
          %315 = sbr.rel (%p313) target = $region24
        $region23: #{tpu_custom_call.1} parent=11 // pred_region
          _
        $region24: #{tpu_custom_call.1} parent=11 // pred_fallthru
          _
        // Predicated region
        $region25: #{tpu_custom_call.1} parent=11 // pred_check
          %p316 = pneg %p182
        $region26: #{tpu_custom_call.1} parent=11 // pred_check_branch
          %318 = sbr.rel (%p316) target = $region28
        $region27: #{tpu_custom_call.1} parent=11 // pred_region
          _
        $region28: #{tpu_custom_call.1} parent=11 // pred_fallthru
          _
        // Predicated region
        $region29: #{tpu_custom_call.1} parent=11 // pred_check
          %p319 = pneg %p203
        $region30: #{tpu_custom_call.1} parent=11 // pred_check_branch
          %321 = sbr.rel (%p319) target = $region32
        $region31: #{tpu_custom_call.1} parent=11 // pred_region
          _
        $region32: #{tpu_custom_call.1} parent=11 // pred_fallthru
          _
        // Predicated region
        $region33: #{tpu_custom_call.1} parent=11 // pred_check
          %p322 = pneg %p224
        $region34: #{tpu_custom_call.1} parent=11 // pred_check_branch
          %324 = sbr.rel (%p322) target = $region36
        $region35: #{tpu_custom_call.1} parent=11 // pred_region
          _
        $region36: #{tpu_custom_call.1} parent=11 // pred_fallthru
          _
        // Predicated region
        $region37: #{tpu_custom_call.1} parent=11 // pred_check
          %p325 = pneg %p245
        $region38: #{tpu_custom_call.1} parent=11 // pred_check_branch
          %327 = sbr.rel (%p325) target = $region40
        $region39: #{tpu_custom_call.1} parent=11 // pred_region
          _
        $region40: #{tpu_custom_call.1} parent=11 // pred_fallthru
          _
        // Predicated region
        $region41: #{tpu_custom_call.1} parent=11 // pred_check
          %p328 = pneg %p266
        $region42: #{tpu_custom_call.1} parent=11 // pred_check_branch
          %330 = sbr.rel (%p328) target = $region44
        $region43: #{tpu_custom_call.1} parent=11 // pred_region
          _
        $region44: #{tpu_custom_call.1} parent=11 // pred_fallthru
          _
      $region12: #{tpu_custom_call.1} parent=5 // pred_fallthru
        _
      %p331 = scmp.lt.s32.totalorder %s20, 2
      // Predicated region
      $region45: #{tpu_custom_call.1} parent=5 // pred_check
        %p332 = pneg %p331
      $region46: #{tpu_custom_call.1} parent=5 // pred_check_branch
        %334 = sbr.rel (%p332) target = $region48
      $region47: #{tpu_custom_call.1} parent=5 // pred_region
        // Predicated region
        $region49: #{tpu_custom_call.1} parent=47 // pred_check
          %p335 = pneg %p40
        $region50: #{tpu_custom_call.1} parent=47 // pred_check_branch
          %337 = sbr.rel (%p335) target = $region52
        $region51: #{tpu_custom_call.1} parent=47 // pred_region
          %p338 = scmp.lt.s32.totalorder %s20, 1
          %s339 = scalar_select %p338, %s20, 1
          %s340 = smul.addr %s339, 8
          %s341 = scalar_lea.vmem %s0, %s340
        $region52: #{tpu_custom_call.1} parent=47 // pred_fallthru
          _
        // Predicated region
        $region53: #{tpu_custom_call.1} parent=47 // pred_check
          %p342 = pneg %p66
        $region54: #{tpu_custom_call.1} parent=47 // pred_check_branch
          %344 = sbr.rel (%p342) target = $region56
        $region55: #{tpu_custom_call.1} parent=47 // pred_region
          %p345 = scmp.lt.s32.totalorder %s20, 1
          %s346 = scalar_select %p345, %s20, 1
          %s347 = smul.addr %s346, 8
          %s348 = scalar_lea.vmem %s1, %s347
        $region56: #{tpu_custom_call.1} parent=47 // pred_fallthru
          _
        // Predicated region
        $region57: #{tpu_custom_call.1} parent=47 // pred_check
          %p349 = pneg %p92
        $region58: #{tpu_custom_call.1} parent=47 // pred_check_branch
          %351 = sbr.rel (%p349) target = $region60
        $region59: #{tpu_custom_call.1} parent=47 // pred_region
          %p352 = scmp.lt.s32.totalorder %s20, 1
          %s353 = scalar_select %p352, %s20, 1
          %s354 = smul.addr %s353, 8
          %s355 = scalar_lea.vmem %s2, %s354
        $region60: #{tpu_custom_call.1} parent=47 // pred_fallthru
          _
      $region48: #{tpu_custom_call.1} parent=5 // pred_fallthru
        _
      %p356 = scmp.le.s32.totalorder 1, %s20
      %p357 = scmp.lt.s32.totalorder %s20, 3
      %p358 = pnand %p356, %p357
      %p359 = pneg %p358
      // Predicated region
      $region61: #{tpu_custom_call.1} parent=5 // pred_check
        _
      $region62: #{tpu_custom_call.1} parent=5 // pred_check_branch
        %361 = sbr.rel (%p358) target = $region64
      $region63: #{tpu_custom_call.1} parent=5 // pred_region
        %s362 = ssub.s32 %s20, 1
        %p363 = scmp.lt.s32.totalorder %s25, 1
        %s364 = scalar_select %p363, %s25, 1
        %s365 = smul.addr %s364, 8
        %s366 = scalar_lea.vmem %s0, %s365
        %p367 = pneg %p46
        %p368 = pneg %p43
        %p369 = scmp.lt.s32.totalorder %s25, 1
        %s370 = scalar_select %p369, %s25, 1
        %s371 = smul.addr %s370, 8
        %s372 = scalar_lea.vmem %s1, %s371
        %p373 = pneg %p72
        %p374 = pneg %p69
        %p375 = scmp.lt.s32.totalorder %s25, 1
        %s376 = scalar_select %p375, %s25, 1
        %s377 = smul.addr %s376, 8
        %s378 = scalar_lea.vmem %s2, %s377
        %p379 = pneg %p98
        %p380 = pneg %p95
        %p381 = pneg %p119
        %p382 = pneg %p116
        %p383 = pneg %p140
        %p384 = pneg %p137
        %p385 = pneg %p161
        %p386 = pneg %p158
        %p387 = pneg %p182
        %p388 = pneg %p179
        %p389 = pneg %p203
        %p390 = pneg %p200
        %p391 = pneg %p224
        %p392 = pneg %p221
        %p393 = pneg %p245
        %p394 = pneg %p242
        %p395 = pneg %p266
        %p396 = pneg %p263
        %p397 = pneg %p292
        %p398 = pneg %p289
        %s399 = sand.u32 %s279, 1
        %s400 = scalar_lea.sflag [#allocation3], %s399
        %s401 = sand.u32 %s279, 1
        %s402 = smul.addr %s401, 8
        %s403 = scalar_lea.vmem [#allocation2], %s402
        %p404 = scmp.lt.s32.totalorder %s25, 1
        %s405 = scalar_select %p404, %s25, 1
        %s406 = smul.addr %s405, 8
        %s407 = scalar_lea.vmem %s0, %s406
        %p408 = scmp.lt.s32.totalorder %s25, 1
        %s409 = scalar_select %p408, %s25, 1
        %s410 = smul.addr %s409, 8
        %s411 = scalar_lea.vmem %s1, %s410
        %p412 = scmp.lt.s32.totalorder %s25, 1
        %s413 = scalar_select %p412, %s25, 1
        %s414 = smul.addr %s413, 8
        %s415 = scalar_lea.vmem %s2, %s414
        %v416 = vld [vmem:[%s407] sm:$0xff]
        %v417 = vld [vmem:[%s411] sm:$0xff]
        %v418 = vld [vmem:[%s415] sm:$0xff]
        %v419 = vld [vmem:[%s3] sm:$0xff]
        %v420 = vld [vmem:[%s3 + $0x8] sm:$0xff]
        %v421 = vld [vmem:[%s3 + $0x10] sm:$0xff]
        %v422 = vld [vmem:[%s3 + $0x18] sm:$0xff]
        %v423 = vld [vmem:[%s3 + $0x20] sm:$0xff]
        %v424 = vld [vmem:[%s3 + $0x28] sm:$0xff]
        %v425 = vld [vmem:[%s3 + $0x30] sm:$0xff]
        %v426 = vld [vmem:[%s3 + $0x38] sm:$0xff]
        %v427 = vld [vmem:[%s3 + $0x40] sm:$0xff]
        %v428 = vld [vmem:[%s3 + $0x48] sm:$0xff]
        %v429 = vld [vmem:[%s3 + $0x50] sm:$0xff]
        %v430 = vld [vmem:[%s3 + $0x58] sm:$0xff]
        %v431 = vld [vmem:[%s3 + $0x60] sm:$0xff]
        %v432 = vld [vmem:[%s3 + $0x68] sm:$0xff]
        %v433 = vld [vmem:[%s3 + $0x70] sm:$0xff]
        %v434 = vld [vmem:[%s3 + $0x78] sm:$0xff]
        %v435 = vld [vmem:[%s4] sm:$0x1]
        %v436 = vld [vmem:[%s4 + $0x1] sm:$0x1]
        %v437 = vld [vmem:[%s4 + $0x2] sm:$0x1]
        %v438 = vld [vmem:[%s4 + $0x3] sm:$0x1]
        %v443 = vlaneseq
        %v444 = vshrl.u32 %v443, 7
        %v445 = vsub.s32 0, %v444
        %v446 = vrot.slane %v435, %v445
        %v447 = vlaneseq
        %v448 = vshrl.u32 %v447, 7
        %v449 = vsub.s32 0, %v448
        %v450 = vrot.slane %v436, %v449
        %v451 = vlaneseq
        %v452 = vshrl.u32 %v451, 7
        %v453 = vsub.s32 0, %v452
        %v454 = vrot.slane %v437, %v453
        %v455 = vlaneseq
        %v456 = vshrl.u32 %v455, 7
        %v457 = vsub.s32 0, %v456
        %v458 = vrot.slane %v438, %v457
        %vm463 = vcmask 261120
        %v465 = vsel %vm463, %v416, 0
        %467 = vmatprep.subr.mxu0 0.0
        %468 = vmatpush1.msra.mxu0 %v419
        %469 = vmatprep.subr.mxu0 0.0
        %470 = vmatpush1.msra.mxu0 %v420
        %471 = vmatprep.subr.mxu0 0.0
        %472 = vmatpush1.msra.mxu0 %v421
        %473 = vmatprep.subr.mxu0 0.0
        %474 = vmatpush1.msra.mxu0 %v422
        %475 = vmatprep.subr.mxu0 0.0
        %476 = vmatpush1.msra.mxu0 0.0
        %477 = vmatprep.subr.mxu0 0.0
        %478 = vmatpush1.msra.mxu0 0.0
        %479 = vmatprep.subr.mxu0 0.0
        %480 = vmatpush1.msra.mxu0 0.0
        %481 = vmatprep.subr.mxu0 0.0
        %482 = vmatpush1.msra.mxu0 0.0
        %483 = vmatprep.subr.mxu0 0.0
        %484 = vmatpush1.msra.mxu0 0.0
        %485 = vmatprep.subr.mxu0 0.0
        %486 = vmatpush1.msra.mxu0 0.0
        %487 = vmatprep.subr.mxu0 0.0
        %488 = vmatpush1.msra.mxu0 0.0
        %489 = vmatprep.subr.mxu0 0.0
        %490 = vmatpush1.msra.mxu0 0.0
        %491 = vmatprep.subr.mxu0 0.0
        %492 = vmatpush1.msra.mxu0 0.0
        %493 = vmatprep.subr.mxu0 0.0
        %494 = vmatpush1.msra.mxu0 0.0
        %495 = vmatprep.subr.mxu0 0.0
        %496 = vmatpush1.msra.mxu0 0.0
        %497 = vmatprep.subr.mxu0 0.0
        %498 = vmatpush1.msra.mxu0 0.0
        %499 = vmatprep.subr.mxu0 0.0
        %500 = vmatpush1.msra.mxu0 0.0
        %501 = vmatprep.subr.mxu0 0.0
        %502 = vmatpush1.msra.mxu0 0.0
        %503 = vmatprep.subr.mxu0 0.0
        %504 = vmatpush1.msra.mxu0 0.0
        %505 = vmatprep.subr.mxu0 0.0
        %506 = vmatpush1.msra.mxu0 0.0
        %507 = vmatprep.subr.mxu0 0.0
        %508 = vmatpush1.msra.mxu0 0.0
        %509 = vmatprep.subr.mxu0 0.0
        %510 = vmatpush1.msra.mxu0 0.0
        %511 = vmatprep.subr.mxu0 0.0
        %512 = vmatpush1.msra.mxu0 0.0
        %513 = vmatprep.subr.mxu0 0.0
        %514 = vmatpush1.msra.mxu0 0.0
        %515 = vmatprep.subr.mxu0 0.0
        %516 = vmatpush1.msra.mxu0 0.0
        %517 = vmatprep.subr.mxu0 0.0
        %518 = vmatpush1.msra.mxu0 0.0
        %519 = vmatprep.subr.mxu0 0.0
        %520 = vmatpush1.msra.mxu0 0.0
        %521 = vmatprep.subr.mxu0 0.0
        %522 = vmatpush1.msra.mxu0 0.0
        %523 = vmatprep.subr.mxu0 0.0
        %524 = vmatpush1.msra.mxu0 0.0
        %525 = vmatprep.subr.mxu0 0.0
        %526 = vmatpush1.msra.mxu0 0.0
        %527 = vmatprep.subr.mxu0 0.0
        %528 = vmatpush1.msra.mxu0 0.0
        %529 = vmatprep.subr.mxu0 0.0
        %530 = vmatpush1.msra.mxu0 0.0
        %531 = vmatprep.mubr.f32.mxu0 0.0
        %532 = vmatmul.mubr.f32.gmra.mrb[0].mxu0 %v465
        %v533 = vpop.f32.mrb[0].mxu0
        %v534 = vadd.f32 %v446, %v533
        %v535 = vpop.f32.mrb[0].mxu0
        %536 = vdwg.mxu0
        %537 = vmatprep.subr.mxu0 0.0
        %538 = vmatpush1.msra.mxu0 %v423
        %539 = vmatprep.subr.mxu0 0.0
        %540 = vmatpush1.msra.mxu0 %v424
        %541 = vmatprep.subr.mxu0 0.0
        %542 = vmatpush1.msra.mxu0 %v425
        %543 = vmatprep.subr.mxu0 0.0
        %544 = vmatpush1.msra.mxu0 %v426
        %545 = vmatprep.subr.mxu0 0.0
        %546 = vmatpush1.msra.mxu0 0.0
        %547 = vmatprep.subr.mxu0 0.0
        %548 = vmatpush1.msra.mxu0 0.0
        %549 = vmatprep.subr.mxu0 0.0
        %550 = vmatpush1.msra.mxu0 0.0
        %551 = vmatprep.subr.mxu0 0.0
        %552 = vmatpush1.msra.mxu0 0.0
        %553 = vmatprep.subr.mxu0 0.0
        %554 = vmatpush1.msra.mxu0 0.0
        %555 = vmatprep.subr.mxu0 0.0
        %556 = vmatpush1.msra.mxu0 0.0
        %557 = vmatprep.subr.mxu0 0.0
        %558 = vmatpush1.msra.mxu0 0.0
        %559 = vmatprep.subr.mxu0 0.0
        %560 = vmatpush1.msra.mxu0 0.0
        %561 = vmatprep.subr.mxu0 0.0
        %562 = vmatpush1.msra.mxu0 0.0
        %563 = vmatprep.subr.mxu0 0.0
        %564 = vmatpush1.msra.mxu0 0.0
        %565 = vmatprep.subr.mxu0 0.0
        %566 = vmatpush1.msra.mxu0 0.0
        %567 = vmatprep.subr.mxu0 0.0
        %568 = vmatpush1.msra.mxu0 0.0
        %569 = vmatprep.subr.mxu0 0.0
        %570 = vmatpush1.msra.mxu0 0.0
        %571 = vmatprep.subr.mxu0 0.0
        %572 = vmatpush1.msra.mxu0 0.0
        %573 = vmatprep.subr.mxu0 0.0
        %574 = vmatpush1.msra.mxu0 0.0
        %575 = vmatprep.subr.mxu0 0.0
        %576 = vmatpush1.msra.mxu0 0.0
        %577 = vmatprep.subr.mxu0 0.0
        %578 = vmatpush1.msra.mxu0 0.0
        %579 = vmatprep.subr.mxu0 0.0
        %580 = vmatpush1.msra.mxu0 0.0
        %581 = vmatprep.subr.mxu0 0.0
        %582 = vmatpush1.msra.mxu0 0.0
        %583 = vmatprep.subr.mxu0 0.0
        %584 = vmatpush1.msra.mxu0 0.0
        %585 = vmatprep.subr.mxu0 0.0
        %586 = vmatpush1.msra.mxu0 0.0
        %587 = vmatprep.subr.mxu0 0.0
        %588 = vmatpush1.msra.mxu0 0.0
        %589 = vmatprep.subr.mxu0 0.0
        %590 = vmatpush1.msra.mxu0 0.0
        %591 = vmatprep.subr.mxu0 0.0
        %592 = vmatpush1.msra.mxu0 0.0
        %593 = vmatprep.subr.mxu0 0.0
        %594 = vmatpush1.msra.mxu0 0.0
        %595 = vmatprep.subr.mxu0 0.0
        %596 = vmatpush1.msra.mxu0 0.0
        %597 = vmatprep.subr.mxu0 0.0
        %598 = vmatpush1.msra.mxu0 0.0
        %599 = vmatprep.subr.mxu0 0.0
        %600 = vmatpush1.msra.mxu0 0.0
        %601 = vmatprep.mubr.f32.mxu0 0.0
        %602 = vmatmul.mubr.f32.gmra.mrb[0].mxu0 %v465
        %v603 = vpop.f32.mrb[0].mxu0
        %v604 = vadd.f32 %v450, %v603
        %v605 = vpop.f32.mrb[0].mxu0
        %606 = vdwg.mxu0
        %607 = vmatprep.subr.mxu0 0.0
        %608 = vmatpush1.msra.mxu0 %v427
        %609 = vmatprep.subr.mxu0 0.0
        %610 = vmatpush1.msra.mxu0 %v428
        %611 = vmatprep.subr.mxu0 0.0
        %612 = vmatpush1.msra.mxu0 %v429
        %613 = vmatprep.subr.mxu0 0.0
        %614 = vmatpush1.msra.mxu0 %v430
        %615 = vmatprep.subr.mxu0 0.0
        %616 = vmatpush1.msra.mxu0 0.0
        %617 = vmatprep.subr.mxu0 0.0
        %618 = vmatpush1.msra.mxu0 0.0
        %619 = vmatprep.subr.mxu0 0.0
        %620 = vmatpush1.msra.mxu0 0.0
        %621 = vmatprep.subr.mxu0 0.0
        %622 = vmatpush1.msra.mxu0 0.0
        %623 = vmatprep.subr.mxu0 0.0
        %624 = vmatpush1.msra.mxu0 0.0
        %625 = vmatprep.subr.mxu0 0.0
        %626 = vmatpush1.msra.mxu0 0.0
        %627 = vmatprep.subr.mxu0 0.0
        %628 = vmatpush1.msra.mxu0 0.0
        %629 = vmatprep.subr.mxu0 0.0
        %630 = vmatpush1.msra.mxu0 0.0
        %631 = vmatprep.subr.mxu0 0.0
        %632 = vmatpush1.msra.mxu0 0.0
        %633 = vmatprep.subr.mxu0 0.0
        %634 = vmatpush1.msra.mxu0 0.0
        %635 = vmatprep.subr.mxu0 0.0
        %636 = vmatpush1.msra.mxu0 0.0
        %637 = vmatprep.subr.mxu0 0.0
        %638 = vmatpush1.msra.mxu0 0.0
        %639 = vmatprep.subr.mxu0 0.0
        %640 = vmatpush1.msra.mxu0 0.0
        %641 = vmatprep.subr.mxu0 0.0
        %642 = vmatpush1.msra.mxu0 0.0
        %643 = vmatprep.subr.mxu0 0.0
        %644 = vmatpush1.msra.mxu0 0.0
        %645 = vmatprep.subr.mxu0 0.0
        %646 = vmatpush1.msra.mxu0 0.0
        %647 = vmatprep.subr.mxu0 0.0
        %648 = vmatpush1.msra.mxu0 0.0
        %649 = vmatprep.subr.mxu0 0.0
        %650 = vmatpush1.msra.mxu0 0.0
        %651 = vmatprep.subr.mxu0 0.0
        %652 = vmatpush1.msra.mxu0 0.0
        %653 = vmatprep.subr.mxu0 0.0
        %654 = vmatpush1.msra.mxu0 0.0
        %655 = vmatprep.subr.mxu0 0.0
        %656 = vmatpush1.msra.mxu0 0.0
        %657 = vmatprep.subr.mxu0 0.0
        %658 = vmatpush1.msra.mxu0 0.0
        %659 = vmatprep.subr.mxu0 0.0
        %660 = vmatpush1.msra.mxu0 0.0
        %661 = vmatprep.subr.mxu0 0.0
        %662 = vmatpush1.msra.mxu0 0.0
        %663 = vmatprep.subr.mxu0 0.0
        %664 = vmatpush1.msra.mxu0 0.0
        %665 = vmatprep.subr.mxu0 0.0
        %666 = vmatpush1.msra.mxu0 0.0
        %667 = vmatprep.subr.mxu0 0.0
        %668 = vmatpush1.msra.mxu0 0.0
        %669 = vmatprep.subr.mxu0 0.0
        %670 = vmatpush1.msra.mxu0 0.0
        %671 = vmatprep.mubr.f32.mxu0 0.0
        %672 = vmatmul.mubr.f32.gmra.mrb[0].mxu0 %v465
        %v673 = vpop.f32.mrb[0].mxu0
        %v674 = vadd.f32 %v454, %v673
        %v675 = vpop.f32.mrb[0].mxu0
        %676 = vdwg.mxu0
        %677 = vmatprep.subr.mxu0 0.0
        %678 = vmatpush1.msra.mxu0 %v431
        %679 = vmatprep.subr.mxu0 0.0
        %680 = vmatpush1.msra.mxu0 %v432
        %681 = vmatprep.subr.mxu0 0.0
        %682 = vmatpush1.msra.mxu0 %v433
        %683 = vmatprep.subr.mxu0 0.0
        %684 = vmatpush1.msra.mxu0 %v434
        %685 = vmatprep.subr.mxu0 0.0
        %686 = vmatpush1.msra.mxu0 0.0
        %687 = vmatprep.subr.mxu0 0.0
        %688 = vmatpush1.msra.mxu0 0.0
        %689 = vmatprep.subr.mxu0 0.0
        %690 = vmatpush1.msra.mxu0 0.0
        %691 = vmatprep.subr.mxu0 0.0
        %692 = vmatpush1.msra.mxu0 0.0
        %693 = vmatprep.subr.mxu0 0.0
        %694 = vmatpush1.msra.mxu0 0.0
        %695 = vmatprep.subr.mxu0 0.0
        %696 = vmatpush1.msra.mxu0 0.0
        %697 = vmatprep.subr.mxu0 0.0
        %698 = vmatpush1.msra.mxu0 0.0
        %699 = vmatprep.subr.mxu0 0.0
        %700 = vmatpush1.msra.mxu0 0.0
        %701 = vmatprep.subr.mxu0 0.0
        %702 = vmatpush1.msra.mxu0 0.0
        %703 = vmatprep.subr.mxu0 0.0
        %704 = vmatpush1.msra.mxu0 0.0
        %705 = vmatprep.subr.mxu0 0.0
        %706 = vmatpush1.msra.mxu0 0.0
        %707 = vmatprep.subr.mxu0 0.0
        %708 = vmatpush1.msra.mxu0 0.0
        %709 = vmatprep.subr.mxu0 0.0
        %710 = vmatpush1.msra.mxu0 0.0
        %711 = vmatprep.subr.mxu0 0.0
        %712 = vmatpush1.msra.mxu0 0.0
        %713 = vmatprep.subr.mxu0 0.0
        %714 = vmatpush1.msra.mxu0 0.0
        %715 = vmatprep.subr.mxu0 0.0
        %716 = vmatpush1.msra.mxu0 0.0
        %717 = vmatprep.subr.mxu0 0.0
        %718 = vmatpush1.msra.mxu0 0.0
        %719 = vmatprep.subr.mxu0 0.0
        %720 = vmatpush1.msra.mxu0 0.0
        %721 = vmatprep.subr.mxu0 0.0
        %722 = vmatpush1.msra.mxu0 0.0
        %723 = vmatprep.subr.mxu0 0.0
        %724 = vmatpush1.msra.mxu0 0.0
        %725 = vmatprep.subr.mxu0 0.0
        %726 = vmatpush1.msra.mxu0 0.0
        %727 = vmatprep.subr.mxu0 0.0
        %728 = vmatpush1.msra.mxu0 0.0
        %729 = vmatprep.subr.mxu0 0.0
        %730 = vmatpush1.msra.mxu0 0.0
        %731 = vmatprep.subr.mxu0 0.0
        %732 = vmatpush1.msra.mxu0 0.0
        %733 = vmatprep.subr.mxu0 0.0
        %734 = vmatpush1.msra.mxu0 0.0
        %735 = vmatprep.subr.mxu0 0.0
        %736 = vmatpush1.msra.mxu0 0.0
        %737 = vmatprep.subr.mxu0 0.0
        %738 = vmatpush1.msra.mxu0 0.0
        %739 = vmatprep.subr.mxu0 0.0
        %740 = vmatpush1.msra.mxu0 0.0
        %741 = vmatprep.mubr.f32.mxu0 0.0
        %742 = vmatmul.mubr.f32.gmra.mrb[0].mxu0 %v465
        %v743 = vpop.f32.mrb[0].mxu0
        %v744 = vadd.f32 %v458, %v743
        %v745 = vpop.f32.mrb[0].mxu0
        %746 = vdwg.mxu0
        %v747 = vld [vmem:[%s5] sm:$0xff]
        %v748 = vld [vmem:[%s5 + $0x8] sm:$0xff]
        %v749 = vld [vmem:[%s5 + $0x10] sm:$0xff]
        %v750 = vld [vmem:[%s5 + $0x18] sm:$0xff]
        %v751 = vld [vmem:[%s5 + $0x20] sm:$0xff]
        %v752 = vld [vmem:[%s5 + $0x28] sm:$0xff]
        %v753 = vld [vmem:[%s5 + $0x30] sm:$0xff]
        %v754 = vld [vmem:[%s5 + $0x38] sm:$0xff]
        %v755 = vld [vmem:[%s5 + $0x40] sm:$0xff]
        %v756 = vld [vmem:[%s5 + $0x48] sm:$0xff]
        %v757 = vld [vmem:[%s5 + $0x50] sm:$0xff]
        %v758 = vld [vmem:[%s5 + $0x58] sm:$0xff]
        %v759 = vld [vmem:[%s5 + $0x60] sm:$0xff]
        %v760 = vld [vmem:[%s5 + $0x68] sm:$0xff]
        %v761 = vld [vmem:[%s5 + $0x70] sm:$0xff]
        %v762 = vld [vmem:[%s5 + $0x78] sm:$0xff]
        %v763 = vld [vmem:[%s6] sm:$0x1]
        %v764 = vld [vmem:[%s6 + $0x1] sm:$0x1]
        %v765 = vld [vmem:[%s6 + $0x2] sm:$0x1]
        %v766 = vld [vmem:[%s6 + $0x3] sm:$0x1]
        %v771 = vlaneseq
        %v772 = vshrl.u32 %v771, 7
        %v773 = vsub.s32 0, %v772
        %v774 = vrot.slane %v763, %v773
        %v775 = vlaneseq
        %v776 = vshrl.u32 %v775, 7
        %v777 = vsub.s32 0, %v776
        %v778 = vrot.slane %v764, %v777
        %v779 = vlaneseq
        %v780 = vshrl.u32 %v779, 7
        %v781 = vsub.s32 0, %v780
        %v782 = vrot.slane %v765, %v781
        %v783 = vlaneseq
        %v784 = vshrl.u32 %v783, 7
        %v785 = vsub.s32 0, %v784
        %v786 = vrot.slane %v766, %v785
        %v792 = vsel %vm463, %v417, 0
        %794 = vmatprep.subr.mxu0 0.0
        %795 = vmatpush1.msra.mxu0 %v747
        %796 = vmatprep.subr.mxu0 0.0
        %797 = vmatpush1.msra.mxu0 %v748
        %798 = vmatprep.subr.mxu0 0.0
        %799 = vmatpush1.msra.mxu0 %v749
        %800 = vmatprep.subr.mxu0 0.0
        %801 = vmatpush1.msra.mxu0 %v750
        %802 = vmatprep.subr.mxu0 0.0
        %803 = vmatpush1.msra.mxu0 0.0
        %804 = vmatprep.subr.mxu0 0.0
        %805 = vmatpush1.msra.mxu0 0.0
        %806 = vmatprep.subr.mxu0 0.0
        %807 = vmatpush1.msra.mxu0 0.0
        %808 = vmatprep.subr.mxu0 0.0
        %809 = vmatpush1.msra.mxu0 0.0
        %810 = vmatprep.subr.mxu0 0.0
        %811 = vmatpush1.msra.mxu0 0.0
        %812 = vmatprep.subr.mxu0 0.0
        %813 = vmatpush1.msra.mxu0 0.0
        %814 = vmatprep.subr.mxu0 0.0
        %815 = vmatpush1.msra.mxu0 0.0
        %816 = vmatprep.subr.mxu0 0.0
        %817 = vmatpush1.msra.mxu0 0.0
        %818 = vmatprep.subr.mxu0 0.0
        %819 = vmatpush1.msra.mxu0 0.0
        %820 = vmatprep.subr.mxu0 0.0
        %821 = vmatpush1.msra.mxu0 0.0
        %822 = vmatprep.subr.mxu0 0.0
        %823 = vmatpush1.msra.mxu0 0.0
        %824 = vmatprep.subr.mxu0 0.0
        %825 = vmatpush1.msra.mxu0 0.0
        %826 = vmatprep.subr.mxu0 0.0
        %827 = vmatpush1.msra.mxu0 0.0
        %828 = vmatprep.subr.mxu0 0.0
        %829 = vmatpush1.msra.mxu0 0.0
        %830 = vmatprep.subr.mxu0 0.0
        %831 = vmatpush1.msra.mxu0 0.0
        %832 = vmatprep.subr.mxu0 0.0
        %833 = vmatpush1.msra.mxu0 0.0
        %834 = vmatprep.subr.mxu0 0.0
        %835 = vmatpush1.msra.mxu0 0.0
        %836 = vmatprep.subr.mxu0 0.0
        %837 = vmatpush1.msra.mxu0 0.0
        %838 = vmatprep.subr.mxu0 0.0
        %839 = vmatpush1.msra.mxu0 0.0
        %840 = vmatprep.subr.mxu0 0.0
        %841 = vmatpush1.msra.mxu0 0.0
        %842 = vmatprep.subr.mxu0 0.0
        %843 = vmatpush1.msra.mxu0 0.0
        %844 = vmatprep.subr.mxu0 0.0
        %845 = vmatpush1.msra.mxu0 0.0
        %846 = vmatprep.subr.mxu0 0.0
        %847 = vmatpush1.msra.mxu0 0.0
        %848 = vmatprep.subr.mxu0 0.0
        %849 = vmatpush1.msra.mxu0 0.0
        %850 = vmatprep.subr.mxu0 0.0
        %851 = vmatpush1.msra.mxu0 0.0
        %852 = vmatprep.subr.mxu0 0.0
        %853 = vmatpush1.msra.mxu0 0.0
        %854 = vmatprep.subr.mxu0 0.0
        %855 = vmatpush1.msra.mxu0 0.0
        %856 = vmatprep.subr.mxu0 0.0
        %857 = vmatpush1.msra.mxu0 0.0
        %858 = vmatprep.mubr.f32.mxu0 0.0
        %859 = vmatmul.mubr.f32.gmra.mrb[0].mxu0 %v792
        %v860 = vpop.f32.mrb[0].mxu0
        %v861 = vadd.f32 %v774, %v860
        %v862 = vpop.f32.mrb[0].mxu0
        %863 = vdwg.mxu0
        %864 = vmatprep.subr.mxu0 0.0
        %865 = vmatpush1.msra.mxu0 %v751
        %866 = vmatprep.subr.mxu0 0.0
        %867 = vmatpush1.msra.mxu0 %v752
        %868 = vmatprep.subr.mxu0 0.0
        %869 = vmatpush1.msra.mxu0 %v753
        %870 = vmatprep.subr.mxu0 0.0
        %871 = vmatpush1.msra.mxu0 %v754
        %872 = vmatprep.subr.mxu0 0.0
        %873 = vmatpush1.msra.mxu0 0.0
        %874 = vmatprep.subr.mxu0 0.0
        %875 = vmatpush1.msra.mxu0 0.0
        %876 = vmatprep.subr.mxu0 0.0
        %877 = vmatpush1.msra.mxu0 0.0
        %878 = vmatprep.subr.mxu0 0.0
        %879 = vmatpush1.msra.mxu0 0.0
        %880 = vmatprep.subr.mxu0 0.0
        %881 = vmatpush1.msra.mxu0 0.0
        %882 = vmatprep.subr.mxu0 0.0
        %883 = vmatpush1.msra.mxu0 0.0
        %884 = vmatprep.subr.mxu0 0.0
        %885 = vmatpush1.msra.mxu0 0.0
        %886 = vmatprep.subr.mxu0 0.0
        %887 = vmatpush1.msra.mxu0 0.0
        %888 = vmatprep.subr.mxu0 0.0
        %889 = vmatpush1.msra.mxu0 0.0
        %890 = vmatprep.subr.mxu0 0.0
        %891 = vmatpush1.msra.mxu0 0.0
        %892 = vmatprep.subr.mxu0 0.0
        %893 = vmatpush1.msra.mxu0 0.0
        %894 = vmatprep.subr.mxu0 0.0
        %895 = vmatpush1.msra.mxu0 0.0
        %896 = vmatprep.subr.mxu0 0.0
        %897 = vmatpush1.msra.mxu0 0.0
        %898 = vmatprep.subr.mxu0 0.0
        %899 = vmatpush1.msra.mxu0 0.0
        %900 = vmatprep.subr.mxu0 0.0
        %901 = vmatpush1.msra.mxu0 0.0
        %902 = vmatprep.subr.mxu0 0.0
        %903 = vmatpush1.msra.mxu0 0.0
        %904 = vmatprep.subr.mxu0 0.0
        %905 = vmatpush1.msra.mxu0 0.0
        %906 = vmatprep.subr.mxu0 0.0
        %907 = vmatpush1.msra.mxu0 0.0
        %908 = vmatprep.subr.mxu0 0.0
        %909 = vmatpush1.msra.mxu0 0.0
        %910 = vmatprep.subr.mxu0 0.0
        %911 = vmatpush1.msra.mxu0 0.0
        %912 = vmatprep.subr.mxu0 0.0
        %913 = vmatpush1.msra.mxu0 0.0
        %914 = vmatprep.subr.mxu0 0.0
        %915 = vmatpush1.msra.mxu0 0.0
        %916 = vmatprep.subr.mxu0 0.0
        %917 = vmatpush1.msra.mxu0 0.0
        %918 = vmatprep.subr.mxu0 0.0
        %919 = vmatpush1.msra.mxu0 0.0
        %920 = vmatprep.subr.mxu0 0.0
        %921 = vmatpush1.msra.mxu0 0.0
        %922 = vmatprep.subr.mxu0 0.0
        %923 = vmatpush1.msra.mxu0 0.0
        %924 = vmatprep.subr.mxu0 0.0
        %925 = vmatpush1.msra.mxu0 0.0
        %926 = vmatprep.subr.mxu0 0.0
        %927 = vmatpush1.msra.mxu0 0.0
        %928 = vmatprep.mubr.f32.mxu0 0.0
        %929 = vmatmul.mubr.f32.gmra.mrb[0].mxu0 %v792
        %v930 = vpop.f32.mrb[0].mxu0
        %v931 = vadd.f32 %v778, %v930
        %v932 = vpop.f32.mrb[0].mxu0
        %933 = vdwg.mxu0
        %934 = vmatprep.subr.mxu0 0.0
        %935 = vmatpush1.msra.mxu0 %v755
        %936 = vmatprep.subr.mxu0 0.0
        %937 = vmatpush1.msra.mxu0 %v756
        %938 = vmatprep.subr.mxu0 0.0
        %939 = vmatpush1.msra.mxu0 %v757
        %940 = vmatprep.subr.mxu0 0.0
        %941 = vmatpush1.msra.mxu0 %v758
        %942 = vmatprep.subr.mxu0 0.0
        %943 = vmatpush1.msra.mxu0 0.0
        %944 = vmatprep.subr.mxu0 0.0
        %945 = vmatpush1.msra.mxu0 0.0
        %946 = vmatprep.subr.mxu0 0.0
        %947 = vmatpush1.msra.mxu0 0.0
        %948 = vmatprep.subr.mxu0 0.0
        %949 = vmatpush1.msra.mxu0 0.0
        %950 = vmatprep.subr.mxu0 0.0
        %951 = vmatpush1.msra.mxu0 0.0
        %952 = vmatprep.subr.mxu0 0.0
        %953 = vmatpush1.msra.mxu0 0.0
        %954 = vmatprep.subr.mxu0 0.0
        %955 = vmatpush1.msra.mxu0 0.0
        %956 = vmatprep.subr.mxu0 0.0
        %957 = vmatpush1.msra.mxu0 0.0
        %958 = vmatprep.subr.mxu0 0.0
        %959 = vmatpush1.msra.mxu0 0.0
        %960 = vmatprep.subr.mxu0 0.0
        %961 = vmatpush1.msra.mxu0 0.0
        %962 = vmatprep.subr.mxu0 0.0
        %963 = vmatpush1.msra.mxu0 0.0
        %964 = vmatprep.subr.mxu0 0.0
        %965 = vmatpush1.msra.mxu0 0.0
        %966 = vmatprep.subr.mxu0 0.0
        %967 = vmatpush1.msra.mxu0 0.0
        %968 = vmatprep.subr.mxu0 0.0
        %969 = vmatpush1.msra.mxu0 0.0
        %970 = vmatprep.subr.mxu0 0.0
        %971 = vmatpush1.msra.mxu0 0.0
        %972 = vmatprep.subr.mxu0 0.0
        %973 = vmatpush1.msra.mxu0 0.0
        %974 = vmatprep.subr.mxu0 0.0
        %975 = vmatpush1.msra.mxu0 0.0
        %976 = vmatprep.subr.mxu0 0.0
        %977 = vmatpush1.msra.mxu0 0.0
        %978 = vmatprep.subr.mxu0 0.0
        %979 = vmatpush1.msra.mxu0 0.0
        %980 = vmatprep.subr.mxu0 0.0
        %981 = vmatpush1.msra.mxu0 0.0
        %982 = vmatprep.subr.mxu0 0.0
        %983 = vmatpush1.msra.mxu0 0.0
        %984 = vmatprep.subr.mxu0 0.0
        %985 = vmatpush1.msra.mxu0 0.0
        %986 = vmatprep.subr.mxu0 0.0
        %987 = vmatpush1.msra.mxu0 0.0
        %988 = vmatprep.subr.mxu0 0.0
        %989 = vmatpush1.msra.mxu0 0.0
        %990 = vmatprep.subr.mxu0 0.0
        %991 = vmatpush1.msra.mxu0 0.0
        %992 = vmatprep.subr.mxu0 0.0
        %993 = vmatpush1.msra.mxu0 0.0
        %994 = vmatprep.subr.mxu0 0.0
        %995 = vmatpush1.msra.mxu0 0.0
        %996 = vmatprep.subr.mxu0 0.0
        %997 = vmatpush1.msra.mxu0 0.0
        %998 = vmatprep.mubr.f32.mxu0 0.0
        %999 = vmatmul.mubr.f32.gmra.mrb[0].mxu0 %v792
        %v1000 = vpop.f32.mrb[0].mxu0
        %v1001 = vadd.f32 %v782, %v1000
        %v1002 = vpop.f32.mrb[0].mxu0
        %1003 = vdwg.mxu0
        %1004 = vmatprep.subr.mxu0 0.0
        %1005 = vmatpush1.msra.mxu0 %v759
        %1006 = vmatprep.subr.mxu0 0.0
        %1007 = vmatpush1.msra.mxu0 %v760
        %1008 = vmatprep.subr.mxu0 0.0
        %1009 = vmatpush1.msra.mxu0 %v761
        %1010 = vmatprep.subr.mxu0 0.0
        %1011 = vmatpush1.msra.mxu0 %v762
        %1012 = vmatprep.subr.mxu0 0.0
        %1013 = vmatpush1.msra.mxu0 0.0
        %1014 = vmatprep.subr.mxu0 0.0
        %1015 = vmatpush1.msra.mxu0 0.0
        %1016 = vmatprep.subr.mxu0 0.0
        %1017 = vmatpush1.msra.mxu0 0.0
        %1018 = vmatprep.subr.mxu0 0.0
        %1019 = vmatpush1.msra.mxu0 0.0
        %1020 = vmatprep.subr.mxu0 0.0
        %1021 = vmatpush1.msra.mxu0 0.0
        %1022 = vmatprep.subr.mxu0 0.0
        %1023 = vmatpush1.msra.mxu0 0.0
        %1024 = vmatprep.subr.mxu0 0.0
        %1025 = vmatpush1.msra.mxu0 0.0
        %1026 = vmatprep.subr.mxu0 0.0
        %1027 = vmatpush1.msra.mxu0 0.0
        %1028 = vmatprep.subr.mxu0 0.0
        %1029 = vmatpush1.msra.mxu0 0.0
        %1030 = vmatprep.subr.mxu0 0.0
        %1031 = vmatpush1.msra.mxu0 0.0
        %1032 = vmatprep.subr.mxu0 0.0
        %1033 = vmatpush1.msra.mxu0 0.0
        %1034 = vmatprep.subr.mxu0 0.0
        %1035 = vmatpush1.msra.mxu0 0.0
        %1036 = vmatprep.subr.mxu0 0.0
        %1037 = vmatpush1.msra.mxu0 0.0
        %1038 = vmatprep.subr.mxu0 0.0
        %1039 = vmatpush1.msra.mxu0 0.0
        %1040 = vmatprep.subr.mxu0 0.0
        %1041 = vmatpush1.msra.mxu0 0.0
        %1042 = vmatprep.subr.mxu0 0.0
        %1043 = vmatpush1.msra.mxu0 0.0
        %1044 = vmatprep.subr.mxu0 0.0
        %1045 = vmatpush1.msra.mxu0 0.0
        %1046 = vmatprep.subr.mxu0 0.0
        %1047 = vmatpush1.msra.mxu0 0.0
        %1048 = vmatprep.subr.mxu0 0.0
        %1049 = vmatpush1.msra.mxu0 0.0
        %1050 = vmatprep.subr.mxu0 0.0
        %1051 = vmatpush1.msra.mxu0 0.0
        %1052 = vmatprep.subr.mxu0 0.0
        %1053 = vmatpush1.msra.mxu0 0.0
        %1054 = vmatprep.subr.mxu0 0.0
        %1055 = vmatpush1.msra.mxu0 0.0
        %1056 = vmatprep.subr.mxu0 0.0
        %1057 = vmatpush1.msra.mxu0 0.0
        %1058 = vmatprep.subr.mxu0 0.0
        %1059 = vmatpush1.msra.mxu0 0.0
        %1060 = vmatprep.subr.mxu0 0.0
        %1061 = vmatpush1.msra.mxu0 0.0
        %1062 = vmatprep.subr.mxu0 0.0
        %1063 = vmatpush1.msra.mxu0 0.0
        %1064 = vmatprep.subr.mxu0 0.0
        %1065 = vmatpush1.msra.mxu0 0.0
        %1066 = vmatprep.subr.mxu0 0.0
        %1067 = vmatpush1.msra.mxu0 0.0
        %1068 = vmatprep.mubr.f32.mxu0 0.0
        %1069 = vmatmul.mubr.f32.gmra.mrb[0].mxu0 %v792
        %v1070 = vpop.f32.mrb[0].mxu0
        %v1071 = vadd.f32 %v786, %v1070
        %v1072 = vpop.f32.mrb[0].mxu0
        %1073 = vdwg.mxu0
        %v1074 = vld [vmem:[%s7] sm:$0xff]
        %v1075 = vld [vmem:[%s7 + $0x8] sm:$0xff]
        %v1076 = vld [vmem:[%s7 + $0x10] sm:$0xff]
        %v1077 = vld [vmem:[%s7 + $0x18] sm:$0xff]
        %v1078 = vld [vmem:[%s7 + $0x20] sm:$0xff]
        %v1079 = vld [vmem:[%s7 + $0x28] sm:$0xff]
        %v1080 = vld [vmem:[%s7 + $0x30] sm:$0xff]
        %v1081 = vld [vmem:[%s7 + $0x38] sm:$0xff]
        %v1082 = vld [vmem:[%s7 + $0x40] sm:$0xff]
        %v1083 = vld [vmem:[%s7 + $0x48] sm:$0xff]
        %v1084 = vld [vmem:[%s7 + $0x50] sm:$0xff]
        %v1085 = vld [vmem:[%s7 + $0x58] sm:$0xff]
        %v1086 = vld [vmem:[%s7 + $0x60] sm:$0xff]
        %v1087 = vld [vmem:[%s7 + $0x68] sm:$0xff]
        %v1088 = vld [vmem:[%s7 + $0x70] sm:$0xff]
        %v1089 = vld [vmem:[%s7 + $0x78] sm:$0xff]
        %v1090 = vld [vmem:[%s8] sm:$0x1]
        %v1091 = vld [vmem:[%s8 + $0x1] sm:$0x1]
        %v1092 = vld [vmem:[%s8 + $0x2] sm:$0x1]
        %v1093 = vld [vmem:[%s8 + $0x3] sm:$0x1]
        %v1098 = vlaneseq
        %v1099 = vshrl.u32 %v1098, 7
        %v1100 = vsub.s32 0, %v1099
        %v1101 = vrot.slane %v1090, %v1100
        %v1102 = vlaneseq
        %v1103 = vshrl.u32 %v1102, 7
        %v1104 = vsub.s32 0, %v1103
        %v1105 = vrot.slane %v1091, %v1104
        %v1106 = vlaneseq
        %v1107 = vshrl.u32 %v1106, 7
        %v1108 = vsub.s32 0, %v1107
        %v1109 = vrot.slane %v1092, %v1108
        %v1110 = vlaneseq
        %v1111 = vshrl.u32 %v1110, 7
        %v1112 = vsub.s32 0, %v1111
        %v1113 = vrot.slane %v1093, %v1112
        %v1119 = vsel %vm463, %v418, 0
        %1121 = vmatprep.subr.mxu0 0.0
        %1122 = vmatpush1.msra.mxu0 %v1074
        %1123 = vmatprep.subr.mxu0 0.0
        %1124 = vmatpush1.msra.mxu0 %v1075
        %1125 = vmatprep.subr.mxu0 0.0
        %1126 = vmatpush1.msra.mxu0 %v1076
        %1127 = vmatprep.subr.mxu0 0.0
        %1128 = vmatpush1.msra.mxu0 %v1077
        %1129 = vmatprep.subr.mxu0 0.0
        %1130 = vmatpush1.msra.mxu0 0.0
        %1131 = vmatprep.subr.mxu0 0.0
        %1132 = vmatpush1.msra.mxu0 0.0
        %1133 = vmatprep.subr.mxu0 0.0
        %1134 = vmatpush1.msra.mxu0 0.0
        %1135 = vmatprep.subr.mxu0 0.0
        %1136 = vmatpush1.msra.mxu0 0.0
        %1137 = vmatprep.subr.mxu0 0.0
        %1138 = vmatpush1.msra.mxu0 0.0
        %1139 = vmatprep.subr.mxu0 0.0
        %1140 = vmatpush1.msra.mxu0 0.0
        %1141 = vmatprep.subr.mxu0 0.0
        %1142 = vmatpush1.msra.mxu0 0.0
        %1143 = vmatprep.subr.mxu0 0.0
        %1144 = vmatpush1.msra.mxu0 0.0
        %1145 = vmatprep.subr.mxu0 0.0
        %1146 = vmatpush1.msra.mxu0 0.0
        %1147 = vmatprep.subr.mxu0 0.0
        %1148 = vmatpush1.msra.mxu0 0.0
        %1149 = vmatprep.subr.mxu0 0.0
        %1150 = vmatpush1.msra.mxu0 0.0
        %1151 = vmatprep.subr.mxu0 0.0
        %1152 = vmatpush1.msra.mxu0 0.0
        %1153 = vmatprep.subr.mxu0 0.0
        %1154 = vmatpush1.msra.mxu0 0.0
        %1155 = vmatprep.subr.mxu0 0.0
        %1156 = vmatpush1.msra.mxu0 0.0
        %1157 = vmatprep.subr.mxu0 0.0
        %1158 = vmatpush1.msra.mxu0 0.0
        %1159 = vmatprep.subr.mxu0 0.0
        %1160 = vmatpush1.msra.mxu0 0.0
        %1161 = vmatprep.subr.mxu0 0.0
        %1162 = vmatpush1.msra.mxu0 0.0
        %1163 = vmatprep.subr.mxu0 0.0
        %1164 = vmatpush1.msra.mxu0 0.0
        %1165 = vmatprep.subr.mxu0 0.0
        %1166 = vmatpush1.msra.mxu0 0.0
        %1167 = vmatprep.subr.mxu0 0.0
        %1168 = vmatpush1.msra.mxu0 0.0
        %1169 = vmatprep.subr.mxu0 0.0
        %1170 = vmatpush1.msra.mxu0 0.0
        %1171 = vmatprep.subr.mxu0 0.0
        %1172 = vmatpush1.msra.mxu0 0.0
        %1173 = vmatprep.subr.mxu0 0.0
        %1174 = vmatpush1.msra.mxu0 0.0
        %1175 = vmatprep.subr.mxu0 0.0
        %1176 = vmatpush1.msra.mxu0 0.0
        %1177 = vmatprep.subr.mxu0 0.0
        %1178 = vmatpush1.msra.mxu0 0.0
        %1179 = vmatprep.subr.mxu0 0.0
        %1180 = vmatpush1.msra.mxu0 0.0
        %1181 = vmatprep.subr.mxu0 0.0
        %1182 = vmatpush1.msra.mxu0 0.0
        %1183 = vmatprep.subr.mxu0 0.0
        %1184 = vmatpush1.msra.mxu0 0.0
        %1185 = vmatprep.mubr.f32.mxu0 0.0
        %1186 = vmatmul.mubr.f32.gmra.mrb[0].mxu0 %v1119
        %v1187 = vpop.f32.mrb[0].mxu0
        %v1188 = vadd.f32 %v1101, %v1187
        %v1189 = vpop.f32.mrb[0].mxu0
        %1190 = vdwg.mxu0
        %1191 = vmatprep.subr.mxu0 0.0
        %1192 = vmatpush1.msra.mxu0 %v1078
        %1193 = vmatprep.subr.mxu0 0.0
        %1194 = vmatpush1.msra.mxu0 %v1079
        %1195 = vmatprep.subr.mxu0 0.0
        %1196 = vmatpush1.msra.mxu0 %v1080
        %1197 = vmatprep.subr.mxu0 0.0
        %1198 = vmatpush1.msra.mxu0 %v1081
        %1199 = vmatprep.subr.mxu0 0.0
        %1200 = vmatpush1.msra.mxu0 0.0
        %1201 = vmatprep.subr.mxu0 0.0
        %1202 = vmatpush1.msra.mxu0 0.0
        %1203 = vmatprep.subr.mxu0 0.0
        %1204 = vmatpush1.msra.mxu0 0.0
        %1205 = vmatprep.subr.mxu0 0.0
        %1206 = vmatpush1.msra.mxu0 0.0
        %1207 = vmatprep.subr.mxu0 0.0
        %1208 = vmatpush1.msra.mxu0 0.0
        %1209 = vmatprep.subr.mxu0 0.0
        %1210 = vmatpush1.msra.mxu0 0.0
        %1211 = vmatprep.subr.mxu0 0.0
        %1212 = vmatpush1.msra.mxu0 0.0
        %1213 = vmatprep.subr.mxu0 0.0
        %1214 = vmatpush1.msra.mxu0 0.0
        %1215 = vmatprep.subr.mxu0 0.0
        %1216 = vmatpush1.msra.mxu0 0.0
        %1217 = vmatprep.subr.mxu0 0.0
        %1218 = vmatpush1.msra.mxu0 0.0
        %1219 = vmatprep.subr.mxu0 0.0
        %1220 = vmatpush1.msra.mxu0 0.0
        %1221 = vmatprep.subr.mxu0 0.0
        %1222 = vmatpush1.msra.mxu0 0.0
        %1223 = vmatprep.subr.mxu0 0.0
        %1224 = vmatpush1.msra.mxu0 0.0
        %1225 = vmatprep.subr.mxu0 0.0
        %1226 = vmatpush1.msra.mxu0 0.0
        %1227 = vmatprep.subr.mxu0 0.0
        %1228 = vmatpush1.msra.mxu0 0.0
        %1229 = vmatprep.subr.mxu0 0.0
        %1230 = vmatpush1.msra.mxu0 0.0
        %1231 = vmatprep.subr.mxu0 0.0
        %1232 = vmatpush1.msra.mxu0 0.0
        %1233 = vmatprep.subr.mxu0 0.0
        %1234 = vmatpush1.msra.mxu0 0.0
        %1235 = vmatprep.subr.mxu0 0.0
        %1236 = vmatpush1.msra.mxu0 0.0
        %1237 = vmatprep.subr.mxu0 0.0
        %1238 = vmatpush1.msra.mxu0 0.0
        %1239 = vmatprep.subr.mxu0 0.0
        %1240 = vmatpush1.msra.mxu0 0.0
        %1241 = vmatprep.subr.mxu0 0.0
        %1242 = vmatpush1.msra.mxu0 0.0
        %1243 = vmatprep.subr.mxu0 0.0
        %1244 = vmatpush1.msra.mxu0 0.0
        %1245 = vmatprep.subr.mxu0 0.0
        %1246 = vmatpush1.msra.mxu0 0.0
        %1247 = vmatprep.subr.mxu0 0.0
        %1248 = vmatpush1.msra.mxu0 0.0
        %1249 = vmatprep.subr.mxu0 0.0
        %1250 = vmatpush1.msra.mxu0 0.0
        %1251 = vmatprep.subr.mxu0 0.0
        %1252 = vmatpush1.msra.mxu0 0.0
        %1253 = vmatprep.subr.mxu0 0.0
        %1254 = vmatpush1.msra.mxu0 0.0
        %1255 = vmatprep.mubr.f32.mxu0 0.0
        %1256 = vmatmul.mubr.f32.gmra.mrb[0].mxu0 %v1119
        %v1257 = vpop.f32.mrb[0].mxu0
        %v1258 = vadd.f32 %v1105, %v1257
        %v1259 = vpop.f32.mrb[0].mxu0
        %1260 = vdwg.mxu0
        %1261 = vmatprep.subr.mxu0 0.0
        %1262 = vmatpush1.msra.mxu0 %v1082
        %1263 = vmatprep.subr.mxu0 0.0
        %1264 = vmatpush1.msra.mxu0 %v1083
        %1265 = vmatprep.subr.mxu0 0.0
        %1266 = vmatpush1.msra.mxu0 %v1084
        %1267 = vmatprep.subr.mxu0 0.0
        %1268 = vmatpush1.msra.mxu0 %v1085
        %1269 = vmatprep.subr.mxu0 0.0
        %1270 = vmatpush1.msra.mxu0 0.0
        %1271 = vmatprep.subr.mxu0 0.0
        %1272 = vmatpush1.msra.mxu0 0.0
        %1273 = vmatprep.subr.mxu0 0.0
        %1274 = vmatpush1.msra.mxu0 0.0
        %1275 = vmatprep.subr.mxu0 0.0
        %1276 = vmatpush1.msra.mxu0 0.0
        %1277 = vmatprep.subr.mxu0 0.0
        %1278 = vmatpush1.msra.mxu0 0.0
        %1279 = vmatprep.subr.mxu0 0.0
        %1280 = vmatpush1.msra.mxu0 0.0
        %1281 = vmatprep.subr.mxu0 0.0
        %1282 = vmatpush1.msra.mxu0 0.0
        %1283 = vmatprep.subr.mxu0 0.0
        %1284 = vmatpush1.msra.mxu0 0.0
        %1285 = vmatprep.subr.mxu0 0.0
        %1286 = vmatpush1.msra.mxu0 0.0
        %1287 = vmatprep.subr.mxu0 0.0
        %1288 = vmatpush1.msra.mxu0 0.0
        %1289 = vmatprep.subr.mxu0 0.0
        %1290 = vmatpush1.msra.mxu0 0.0
        %1291 = vmatprep.subr.mxu0 0.0
        %1292 = vmatpush1.msra.mxu0 0.0
        %1293 = vmatprep.subr.mxu0 0.0
        %1294 = vmatpush1.msra.mxu0 0.0
        %1295 = vmatprep.subr.mxu0 0.0
        %1296 = vmatpush1.msra.mxu0 0.0
        %1297 = vmatprep.subr.mxu0 0.0
        %1298 = vmatpush1.msra.mxu0 0.0
        %1299 = vmatprep.subr.mxu0 0.0
        %1300 = vmatpush1.msra.mxu0 0.0
        %1301 = vmatprep.subr.mxu0 0.0
        %1302 = vmatpush1.msra.mxu0 0.0
        %1303 = vmatprep.subr.mxu0 0.0
        %1304 = vmatpush1.msra.mxu0 0.0
        %1305 = vmatprep.subr.mxu0 0.0
        %1306 = vmatpush1.msra.mxu0 0.0
        %1307 = vmatprep.subr.mxu0 0.0
        %1308 = vmatpush1.msra.mxu0 0.0
        %1309 = vmatprep.subr.mxu0 0.0
        %1310 = vmatpush1.msra.mxu0 0.0
        %1311 = vmatprep.subr.mxu0 0.0
        %1312 = vmatpush1.msra.mxu0 0.0
        %1313 = vmatprep.subr.mxu0 0.0
        %1314 = vmatpush1.msra.mxu0 0.0
        %1315 = vmatprep.subr.mxu0 0.0
        %1316 = vmatpush1.msra.mxu0 0.0
        %1317 = vmatprep.subr.mxu0 0.0
        %1318 = vmatpush1.msra.mxu0 0.0
        %1319 = vmatprep.subr.mxu0 0.0
        %1320 = vmatpush1.msra.mxu0 0.0
        %1321 = vmatprep.subr.mxu0 0.0
        %1322 = vmatpush1.msra.mxu0 0.0
        %1323 = vmatprep.subr.mxu0 0.0
        %1324 = vmatpush1.msra.mxu0 0.0
        %1325 = vmatprep.mubr.f32.mxu0 0.0
        %1326 = vmatmul.mubr.f32.gmra.mrb[0].mxu0 %v1119
        %v1327 = vpop.f32.mrb[0].mxu0
        %v1328 = vadd.f32 %v1109, %v1327
        %v1329 = vpop.f32.mrb[0].mxu0
        %1330 = vdwg.mxu0
        %1331 = vmatprep.subr.mxu0 0.0
        %1332 = vmatpush1.msra.mxu0 %v1086
        %1333 = vmatprep.subr.mxu0 0.0
        %1334 = vmatpush1.msra.mxu0 %v1087
        %1335 = vmatprep.subr.mxu0 0.0
        %1336 = vmatpush1.msra.mxu0 %v1088
        %1337 = vmatprep.subr.mxu0 0.0
        %1338 = vmatpush1.msra.mxu0 %v1089
        %1339 = vmatprep.subr.mxu0 0.0
        %1340 = vmatpush1.msra.mxu0 0.0
        %1341 = vmatprep.subr.mxu0 0.0
        %1342 = vmatpush1.msra.mxu0 0.0
        %1343 = vmatprep.subr.mxu0 0.0
        %1344 = vmatpush1.msra.mxu0 0.0
        %1345 = vmatprep.subr.mxu0 0.0
        %1346 = vmatpush1.msra.mxu0 0.0
        %1347 = vmatprep.subr.mxu0 0.0
        %1348 = vmatpush1.msra.mxu0 0.0
        %1349 = vmatprep.subr.mxu0 0.0
        %1350 = vmatpush1.msra.mxu0 0.0
        %1351 = vmatprep.subr.mxu0 0.0
        %1352 = vmatpush1.msra.mxu0 0.0
        %1353 = vmatprep.subr.mxu0 0.0
        %1354 = vmatpush1.msra.mxu0 0.0
        %1355 = vmatprep.subr.mxu0 0.0
        %1356 = vmatpush1.msra.mxu0 0.0
        %1357 = vmatprep.subr.mxu0 0.0
        %1358 = vmatpush1.msra.mxu0 0.0
        %1359 = vmatprep.subr.mxu0 0.0
        %1360 = vmatpush1.msra.mxu0 0.0
        %1361 = vmatprep.subr.mxu0 0.0
        %1362 = vmatpush1.msra.mxu0 0.0
        %1363 = vmatprep.subr.mxu0 0.0
        %1364 = vmatpush1.msra.mxu0 0.0
        %1365 = vmatprep.subr.mxu0 0.0
        %1366 = vmatpush1.msra.mxu0 0.0
        %1367 = vmatprep.subr.mxu0 0.0
        %1368 = vmatpush1.msra.mxu0 0.0
        %1369 = vmatprep.subr.mxu0 0.0
        %1370 = vmatpush1.msra.mxu0 0.0
        %1371 = vmatprep.subr.mxu0 0.0
        %1372 = vmatpush1.msra.mxu0 0.0
        %1373 = vmatprep.subr.mxu0 0.0
        %1374 = vmatpush1.msra.mxu0 0.0
        %1375 = vmatprep.subr.mxu0 0.0
        %1376 = vmatpush1.msra.mxu0 0.0
        %1377 = vmatprep.subr.mxu0 0.0
        %1378 = vmatpush1.msra.mxu0 0.0
        %1379 = vmatprep.subr.mxu0 0.0
        %1380 = vmatpush1.msra.mxu0 0.0
        %1381 = vmatprep.subr.mxu0 0.0
        %1382 = vmatpush1.msra.mxu0 0.0
        %1383 = vmatprep.subr.mxu0 0.0
        %1384 = vmatpush1.msra.mxu0 0.0
        %1385 = vmatprep.subr.mxu0 0.0
        %1386 = vmatpush1.msra.mxu0 0.0
        %1387 = vmatprep.subr.mxu0 0.0
        %1388 = vmatpush1.msra.mxu0 0.0
        %1389 = vmatprep.subr.mxu0 0.0
        %1390 = vmatpush1.msra.mxu0 0.0
        %1391 = vmatprep.subr.mxu0 0.0
        %1392 = vmatpush1.msra.mxu0 0.0
        %1393 = vmatprep.subr.mxu0 0.0
        %1394 = vmatpush1.msra.mxu0 0.0
        %1395 = vmatprep.mubr.f32.mxu0 0.0
        %1396 = vmatmul.mubr.f32.gmra.mrb[0].mxu0 %v1119
        %v1397 = vpop.f32.mrb[0].mxu0
        %v1398 = vadd.f32 %v1113, %v1397
        %v1399 = vpop.f32.mrb[0].mxu0
        %1400 = vdwg.mxu0
        %vm1401 = vcmask 64512
        %v1403 = vsel %vm1401, %v534, 0
        %v1406 = vsel %vm1401, %v861, 0
        %1408 = vmatprep.subr.mxu0 0.0
        %1409 = vmatpush1.xpose.msra.mxu0 %v1406
        %1410 = vmatprep.subr.mxu0 0.0
        %1411 = vmatpush1.xpose.msra.mxu0 0.0
        %1412 = vmatprep.subr.mxu0 0.0
        %1413 = vmatpush1.xpose.msra.mxu0 0.0
        %1414 = vmatprep.subr.mxu0 0.0
        %1415 = vmatpush1.xpose.msra.mxu0 0.0
        %1416 = vmatprep.subr.mxu0 0.0
        %1417 = vmatpush1.xpose.msra.mxu0 0.0
        %1418 = vmatprep.subr.mxu0 0.0
        %1419 = vmatpush1.xpose.msra.mxu0 0.0
        %1420 = vmatprep.subr.mxu0 0.0
        %1421 = vmatpush1.xpose.msra.mxu0 0.0
        %1422 = vmatprep.subr.mxu0 0.0
        %1423 = vmatpush1.xpose.msra.mxu0 0.0
        %1424 = vmatprep.subr.mxu0 0.0
        %1425 = vmatpush1.xpose.msra.mxu0 0.0
        %1426 = vmatprep.subr.mxu0 0.0
        %1427 = vmatpush1.xpose.msra.mxu0 0.0
        %1428 = vmatprep.subr.mxu0 0.0
        %1429 = vmatpush1.xpose.msra.mxu0 0.0
        %1430 = vmatprep.subr.mxu0 0.0
        %1431 = vmatpush1.xpose.msra.mxu0 0.0
        %1432 = vmatprep.subr.mxu0 0.0
        %1433 = vmatpush1.xpose.msra.mxu0 0.0
        %1434 = vmatprep.subr.mxu0 0.0
        %1435 = vmatpush1.xpose.msra.mxu0 0.0
        %1436 = vmatprep.subr.mxu0 0.0
        %1437 = vmatpush1.xpose.msra.mxu0 0.0
        %1438 = vmatprep.subr.mxu0 0.0
        %1439 = vmatpush1.xpose.msra.mxu0 0.0
        %1440 = vmatprep.subr.mxu0 0.0
        %1441 = vmatpush1.xpose.msra.mxu0 0.0
        %1442 = vmatprep.subr.mxu0 0.0
        %1443 = vmatpush1.xpose.msra.mxu0 0.0
        %1444 = vmatprep.subr.mxu0 0.0
        %1445 = vmatpush1.xpose.msra.mxu0 0.0
        %1446 = vmatprep.subr.mxu0 0.0
        %1447 = vmatpush1.xpose.msra.mxu0 0.0
        %1448 = vmatprep.subr.mxu0 0.0
        %1449 = vmatpush1.xpose.msra.mxu0 0.0
        %1450 = vmatprep.subr.mxu0 0.0
        %1451 = vmatpush1.xpose.msra.mxu0 0.0
        %1452 = vmatprep.subr.mxu0 0.0
        %1453 = vmatpush1.xpose.msra.mxu0 0.0
        %1454 = vmatprep.subr.mxu0 0.0
        %1455 = vmatpush1.xpose.msra.mxu0 0.0
        %1456 = vmatprep.subr.mxu0 0.0
        %1457 = vmatpush1.xpose.msra.mxu0 0.0
        %1458 = vmatprep.subr.mxu0 0.0
        %1459 = vmatpush1.xpose.msra.mxu0 0.0
        %1460 = vmatprep.subr.mxu0 0.0
        %1461 = vmatpush1.xpose.msra.mxu0 0.0
        %1462 = vmatprep.subr.mxu0 0.0
        %1463 = vmatpush1.xpose.msra.mxu0 0.0
        %1464 = vmatprep.subr.mxu0 0.0
        %1465 = vmatpush1.xpose.msra.mxu0 0.0
        %1466 = vmatprep.subr.mxu0 0.0
        %1467 = vmatpush1.xpose.msra.mxu0 0.0
        %1468 = vmatprep.subr.mxu0 0.0
        %1469 = vmatpush1.xpose.msra.mxu0 0.0
        %1470 = vmatprep.subr.mxu0 0.0
        %1471 = vmatpush1.xpose.msra.mxu0 0.0
        %1472 = vmatprep.mubr.f32.mxu0 0.0
        %1473 = vmatmul.mubr.f32.gmra.mrb[0].mxu0 %v1403
        %v1474 = vpop.f32.mrb[0].mxu0
        %v1475 = vadd.f32 0.0, %v1474
        %v1476 = vpop.f32.mrb[0].mxu0
        %1477 = vdwg.mxu0
        %v1479 = vsel %vm1401, %v604, 0
        %v1482 = vsel %vm1401, %v931, 0
        %1484 = vmatprep.subr.mxu0 0.0
        %1485 = vmatpush1.xpose.msra.mxu0 %v1482
        %1486 = vmatprep.subr.mxu0 0.0
        %1487 = vmatpush1.xpose.msra.mxu0 0.0
        %1488 = vmatprep.subr.mxu0 0.0
        %1489 = vmatpush1.xpose.msra.mxu0 0.0
        %1490 = vmatprep.subr.mxu0 0.0
        %1491 = vmatpush1.xpose.msra.mxu0 0.0
        %1492 = vmatprep.subr.mxu0 0.0
        %1493 = vmatpush1.xpose.msra.mxu0 0.0
        %1494 = vmatprep.subr.mxu0 0.0
        %1495 = vmatpush1.xpose.msra.mxu0 0.0
        %1496 = vmatprep.subr.mxu0 0.0
        %1497 = vmatpush1.xpose.msra.mxu0 0.0
        %1498 = vmatprep.subr.mxu0 0.0
        %1499 = vmatpush1.xpose.msra.mxu0 0.0
        %1500 = vmatprep.subr.mxu0 0.0
        %1501 = vmatpush1.xpose.msra.mxu0 0.0
        %1502 = vmatprep.subr.mxu0 0.0
        %1503 = vmatpush1.xpose.msra.mxu0 0.0
        %1504 = vmatprep.subr.mxu0 0.0
        %1505 = vmatpush1.xpose.msra.mxu0 0.0
        %1506 = vmatprep.subr.mxu0 0.0
        %1507 = vmatpush1.xpose.msra.mxu0 0.0
        %1508 = vmatprep.subr.mxu0 0.0
        %1509 = vmatpush1.xpose.msra.mxu0 0.0
        %1510 = vmatprep.subr.mxu0 0.0
        %1511 = vmatpush1.xpose.msra.mxu0 0.0
        %1512 = vmatprep.subr.mxu0 0.0
        %1513 = vmatpush1.xpose.msra.mxu0 0.0
        %1514 = vmatprep.subr.mxu0 0.0
        %1515 = vmatpush1.xpose.msra.mxu0 0.0
        %1516 = vmatprep.subr.mxu0 0.0
        %1517 = vmatpush1.xpose.msra.mxu0 0.0
        %1518 = vmatprep.subr.mxu0 0.0
        %1519 = vmatpush1.xpose.msra.mxu0 0.0
        %1520 = vmatprep.subr.mxu0 0.0
        %1521 = vmatpush1.xpose.msra.mxu0 0.0
        %1522 = vmatprep.subr.mxu0 0.0
        %1523 = vmatpush1.xpose.msra.mxu0 0.0
        %1524 = vmatprep.subr.mxu0 0.0
        %1525 = vmatpush1.xpose.msra.mxu0 0.0
        %1526 = vmatprep.subr.mxu0 0.0
        %1527 = vmatpush1.xpose.msra.mxu0 0.0
        %1528 = vmatprep.subr.mxu0 0.0
        %1529 = vmatpush1.xpose.msra.mxu0 0.0
        %1530 = vmatprep.subr.mxu0 0.0
        %1531 = vmatpush1.xpose.msra.mxu0 0.0
        %1532 = vmatprep.subr.mxu0 0.0
        %1533 = vmatpush1.xpose.msra.mxu0 0.0
        %1534 = vmatprep.subr.mxu0 0.0
        %1535 = vmatpush1.xpose.msra.mxu0 0.0
        %1536 = vmatprep.subr.mxu0 0.0
        %1537 = vmatpush1.xpose.msra.mxu0 0.0
        %1538 = vmatprep.subr.mxu0 0.0
        %1539 = vmatpush1.xpose.msra.mxu0 0.0
        %1540 = vmatprep.subr.mxu0 0.0
        %1541 = vmatpush1.xpose.msra.mxu0 0.0
        %1542 = vmatprep.subr.mxu0 0.0
        %1543 = vmatpush1.xpose.msra.mxu0 0.0
        %1544 = vmatprep.subr.mxu0 0.0
        %1545 = vmatpush1.xpose.msra.mxu0 0.0
        %1546 = vmatprep.subr.mxu0 0.0
        %1547 = vmatpush1.xpose.msra.mxu0 0.0
        %1548 = vmatprep.mubr.f32.mxu0 0.0
        %1549 = vmatmul.mubr.f32.gmra.mrb[0].mxu0 %v1479
        %v1550 = vpop.f32.mrb[0].mxu0
        %v1551 = vadd.f32 0.0, %v1550
        %v1552 = vpop.f32.mrb[0].mxu0
        %1553 = vdwg.mxu0
        %v1555 = vsel %vm1401, %v674, 0
        %v1558 = vsel %vm1401, %v1001, 0
        %1560 = vmatprep.subr.mxu0 0.0
        %1561 = vmatpush1.xpose.msra.mxu0 %v1558
        %1562 = vmatprep.subr.mxu0 0.0
        %1563 = vmatpush1.xpose.msra.mxu0 0.0
        %1564 = vmatprep.subr.mxu0 0.0
        %1565 = vmatpush1.xpose.msra.mxu0 0.0
        %1566 = vmatprep.subr.mxu0 0.0
        %1567 = vmatpush1.xpose.msra.mxu0 0.0
        %1568 = vmatprep.subr.mxu0 0.0
        %1569 = vmatpush1.xpose.msra.mxu0 0.0
        %1570 = vmatprep.subr.mxu0 0.0
        %1571 = vmatpush1.xpose.msra.mxu0 0.0
        %1572 = vmatprep.subr.mxu0 0.0
        %1573 = vmatpush1.xpose.msra.mxu0 0.0
        %1574 = vmatprep.subr.mxu0 0.0
        %1575 = vmatpush1.xpose.msra.mxu0 0.0
        %1576 = vmatprep.subr.mxu0 0.0
        %1577 = vmatpush1.xpose.msra.mxu0 0.0
        %1578 = vmatprep.subr.mxu0 0.0
        %1579 = vmatpush1.xpose.msra.mxu0 0.0
        %1580 = vmatprep.subr.mxu0 0.0
        %1581 = vmatpush1.xpose.msra.mxu0 0.0
        %1582 = vmatprep.subr.mxu0 0.0
        %1583 = vmatpush1.xpose.msra.mxu0 0.0
        %1584 = vmatprep.subr.mxu0 0.0
        %1585 = vmatpush1.xpose.msra.mxu0 0.0
        %1586 = vmatprep.subr.mxu0 0.0
        %1587 = vmatpush1.xpose.msra.mxu0 0.0
        %1588 = vmatprep.subr.mxu0 0.0
        %1589 = vmatpush1.xpose.msra.mxu0 0.0
        %1590 = vmatprep.subr.mxu0 0.0
        %1591 = vmatpush1.xpose.msra.mxu0 0.0
        %1592 = vmatprep.subr.mxu0 0.0
        %1593 = vmatpush1.xpose.msra.mxu0 0.0
        %1594 = vmatprep.subr.mxu0 0.0
        %1595 = vmatpush1.xpose.msra.mxu0 0.0
        %1596 = vmatprep.subr.mxu0 0.0
        %1597 = vmatpush1.xpose.msra.mxu0 0.0
        %1598 = vmatprep.subr.mxu0 0.0
        %1599 = vmatpush1.xpose.msra.mxu0 0.0
        %1600 = vmatprep.subr.mxu0 0.0
        %1601 = vmatpush1.xpose.msra.mxu0 0.0
        %1602 = vmatprep.subr.mxu0 0.0
        %1603 = vmatpush1.xpose.msra.mxu0 0.0
        %1604 = vmatprep.subr.mxu0 0.0
        %1605 = vmatpush1.xpose.msra.mxu0 0.0
        %1606 = vmatprep.subr.mxu0 0.0
        %1607 = vmatpush1.xpose.msra.mxu0 0.0
        %1608 = vmatprep.subr.mxu0 0.0
        %1609 = vmatpush1.xpose.msra.mxu0 0.0
        %1610 = vmatprep.subr.mxu0 0.0
        %1611 = vmatpush1.xpose.msra.mxu0 0.0
        %1612 = vmatprep.subr.mxu0 0.0
        %1613 = vmatpush1.xpose.msra.mxu0 0.0
        %1614 = vmatprep.subr.mxu0 0.0
        %1615 = vmatpush1.xpose.msra.mxu0 0.0
        %1616 = vmatprep.subr.mxu0 0.0
        %1617 = vmatpush1.xpose.msra.mxu0 0.0
        %1618 = vmatprep.subr.mxu0 0.0
        %1619 = vmatpush1.xpose.msra.mxu0 0.0
        %1620 = vmatprep.subr.mxu0 0.0
        %1621 = vmatpush1.xpose.msra.mxu0 0.0
        %1622 = vmatprep.subr.mxu0 0.0
        %1623 = vmatpush1.xpose.msra.mxu0 0.0
        %1624 = vmatprep.mubr.f32.mxu0 0.0
        %1625 = vmatmul.mubr.f32.gmra.mrb[0].mxu0 %v1555
        %v1626 = vpop.f32.mrb[0].mxu0
        %v1627 = vadd.f32 0.0, %v1626
        %v1628 = vpop.f32.mrb[0].mxu0
        %1629 = vdwg.mxu0
        %v1631 = vsel %vm1401, %v744, 0
        %v1634 = vsel %vm1401, %v1071, 0
        %1636 = vmatprep.subr.mxu0 0.0
        %1637 = vmatpush1.xpose.msra.mxu0 %v1634
        %1638 = vmatprep.subr.mxu0 0.0
        %1639 = vmatpush1.xpose.msra.mxu0 0.0
        %1640 = vmatprep.subr.mxu0 0.0
        %1641 = vmatpush1.xpose.msra.mxu0 0.0
        %1642 = vmatprep.subr.mxu0 0.0
        %1643 = vmatpush1.xpose.msra.mxu0 0.0
        %1644 = vmatprep.subr.mxu0 0.0
        %1645 = vmatpush1.xpose.msra.mxu0 0.0
        %1646 = vmatprep.subr.mxu0 0.0
        %1647 = vmatpush1.xpose.msra.mxu0 0.0
        %1648 = vmatprep.subr.mxu0 0.0
        %1649 = vmatpush1.xpose.msra.mxu0 0.0
        %1650 = vmatprep.subr.mxu0 0.0
        %1651 = vmatpush1.xpose.msra.mxu0 0.0
        %1652 = vmatprep.subr.mxu0 0.0
        %1653 = vmatpush1.xpose.msra.mxu0 0.0
        %1654 = vmatprep.subr.mxu0 0.0
        %1655 = vmatpush1.xpose.msra.mxu0 0.0
        %1656 = vmatprep.subr.mxu0 0.0
        %1657 = vmatpush1.xpose.msra.mxu0 0.0
        %1658 = vmatprep.subr.mxu0 0.0
        %1659 = vmatpush1.xpose.msra.mxu0 0.0
        %1660 = vmatprep.subr.mxu0 0.0
        %1661 = vmatpush1.xpose.msra.mxu0 0.0
        %1662 = vmatprep.subr.mxu0 0.0
        %1663 = vmatpush1.xpose.msra.mxu0 0.0
        %1664 = vmatprep.subr.mxu0 0.0
        %1665 = vmatpush1.xpose.msra.mxu0 0.0
        %1666 = vmatprep.subr.mxu0 0.0
        %1667 = vmatpush1.xpose.msra.mxu0 0.0
        %1668 = vmatprep.subr.mxu0 0.0
        %1669 = vmatpush1.xpose.msra.mxu0 0.0
        %1670 = vmatprep.subr.mxu0 0.0
        %1671 = vmatpush1.xpose.msra.mxu0 0.0
        %1672 = vmatprep.subr.mxu0 0.0
        %1673 = vmatpush1.xpose.msra.mxu0 0.0
        %1674 = vmatprep.subr.mxu0 0.0
        %1675 = vmatpush1.xpose.msra.mxu0 0.0
        %1676 = vmatprep.subr.mxu0 0.0
        %1677 = vmatpush1.xpose.msra.mxu0 0.0
        %1678 = vmatprep.subr.mxu0 0.0
        %1679 = vmatpush1.xpose.msra.mxu0 0.0
        %1680 = vmatprep.subr.mxu0 0.0
        %1681 = vmatpush1.xpose.msra.mxu0 0.0
        %1682 = vmatprep.subr.mxu0 0.0
        %1683 = vmatpush1.xpose.msra.mxu0 0.0
        %1684 = vmatprep.subr.mxu0 0.0
        %1685 = vmatpush1.xpose.msra.mxu0 0.0
        %1686 = vmatprep.subr.mxu0 0.0
        %1687 = vmatpush1.xpose.msra.mxu0 0.0
        %1688 = vmatprep.subr.mxu0 0.0
        %1689 = vmatpush1.xpose.msra.mxu0 0.0
        %1690 = vmatprep.subr.mxu0 0.0
        %1691 = vmatpush1.xpose.msra.mxu0 0.0
        %1692 = vmatprep.subr.mxu0 0.0
        %1693 = vmatpush1.xpose.msra.mxu0 0.0
        %1694 = vmatprep.subr.mxu0 0.0
        %1695 = vmatpush1.xpose.msra.mxu0 0.0
        %1696 = vmatprep.subr.mxu0 0.0
        %1697 = vmatpush1.xpose.msra.mxu0 0.0
        %1698 = vmatprep.subr.mxu0 0.0
        %1699 = vmatpush1.xpose.msra.mxu0 0.0
        %1700 = vmatprep.mubr.f32.mxu0 0.0
        %1701 = vmatmul.mubr.f32.gmra.mrb[0].mxu0 %v1631
        %v1702 = vpop.f32.mrb[0].mxu0
        %v1703 = vadd.f32 0.0, %v1702
        %v1704 = vpop.f32.mrb[0].mxu0
        %1705 = vdwg.mxu0
        %v1706 = vlaneseq
        %v1707 = vshrl.u32 %v1706, 7
        %v1708 = vlaneseq
        %v1709 = vand.u32 %v1708, 127
        %vm1710 = vcmp.ge.s32.totalorder %v1707, %v1709
        %v1711 = vsel %vm1710, 1, 0
        %vm1712 = vcmp.eq.s32.totalorder %v1711, 1
        %v1713 = vsel %vm1712, %v1475, -1e+30
        %v1714 = vsel %vm1712, %v1551, -1e+30
        %v1715 = vsel %vm1712, %v1627, -1e+30
        %v1716 = vsel %vm1712, %v1703, -1e+30
        %v1717 = vsel %vm1401, %v1713, -inf
        %1718 = vmax.xlane.f32.xlu0 %v1717
        %v1719 = vpop.xlane.xlu0 %1718
        %v1720 = vsel %vm1401, %v1714, -inf
        %1721 = vmax.xlane.f32.xlu0 %v1720
        %v1722 = vpop.xlane.xlu0 %1721
        %v1723 = vsel %vm1401, %v1715, -inf
        %1724 = vmax.xlane.f32.xlu0 %v1723
        %v1725 = vpop.xlane.xlu0 %1724
        %v1726 = vsel %vm1401, %v1716, -inf
        %1727 = vmax.xlane.f32.xlu0 %v1726
        %v1728 = vpop.xlane.xlu0 %1727
        %v1729 = vsub.f32 %v1713, %v1719
        %v1730 = vsub.f32 %v1714, %v1722
        %v1731 = vsub.f32 %v1715, %v1725
        %v1732 = vsub.f32 %v1716, %v1728
        %v1733 = vmul.f32 %v1729, 1.442695
        %v1734 = vpow.pop %v1733
        %v1735 = vmul.f32 %v1730, 1.442695
        %v1736 = vpow.pop %v1735
        %v1737 = vmul.f32 %v1731, 1.442695
        %v1738 = vpow.pop %v1737
        %v1739 = vmul.f32 %v1732, 1.442695
        %v1740 = vpow.pop %v1739
        %v1741 = vsel %vm1401, %v1734, 0.0
        %1742 = vadd.xlane.f32.xlu0 %v1741
        %v1743 = vpop.xlane.xlu0 %1742
        %v1744 = vsel %vm1401, %v1736, 0.0
        %1745 = vadd.xlane.f32.xlu0 %v1744
        %v1746 = vpop.xlane.xlu0 %1745
        %v1747 = vsel %vm1401, %v1738, 0.0
        %1748 = vadd.xlane.f32.xlu0 %v1747
        %v1749 = vpop.xlane.xlu0 %1748
        %v1750 = vsel %vm1401, %v1740, 0.0
        %1751 = vadd.xlane.f32.xlu0 %v1750
        %v1752 = vpop.xlane.xlu0 %1751
        %v1754 = vsel %vm1401, %v1734, 0
        %1756 = vmatprep.subr.mxu0 0.0
        %1757 = vmatpush1.msra.mxu0 %v1188
        %1758 = vmatprep.subr.mxu0 0.0
        %1759 = vmatpush1.msra.mxu0 0.0
        %1760 = vmatprep.subr.mxu0 0.0
        %1761 = vmatpush1.msra.mxu0 0.0
        %1762 = vmatprep.subr.mxu0 0.0
        %1763 = vmatpush1.msra.mxu0 0.0
        %1764 = vmatprep.subr.mxu0 0.0
        %1765 = vmatpush1.msra.mxu0 0.0
        %1766 = vmatprep.subr.mxu0 0.0
        %1767 = vmatpush1.msra.mxu0 0.0
        %1768 = vmatprep.subr.mxu0 0.0
        %1769 = vmatpush1.msra.mxu0 0.0
        %1770 = vmatprep.subr.mxu0 0.0
        %1771 = vmatpush1.msra.mxu0 0.0
        %1772 = vmatprep.subr.mxu0 0.0
        %1773 = vmatpush1.msra.mxu0 0.0
        %1774 = vmatprep.subr.mxu0 0.0
        %1775 = vmatpush1.msra.mxu0 0.0
        %1776 = vmatprep.subr.mxu0 0.0
        %1777 = vmatpush1.msra.mxu0 0.0
        %1778 = vmatprep.subr.mxu0 0.0
        %1779 = vmatpush1.msra.mxu0 0.0
        %1780 = vmatprep.subr.mxu0 0.0
        %1781 = vmatpush1.msra.mxu0 0.0
        %1782 = vmatprep.subr.mxu0 0.0
        %1783 = vmatpush1.msra.mxu0 0.0
        %1784 = vmatprep.subr.mxu0 0.0
        %1785 = vmatpush1.msra.mxu0 0.0
        %1786 = vmatprep.subr.mxu0 0.0
        %1787 = vmatpush1.msra.mxu0 0.0
        %1788 = vmatprep.subr.mxu0 0.0
        %1789 = vmatpush1.msra.mxu0 0.0
        %1790 = vmatprep.subr.mxu0 0.0
        %1791 = vmatpush1.msra.mxu0 0.0
        %1792 = vmatprep.subr.mxu0 0.0
        %1793 = vmatpush1.msra.mxu0 0.0
        %1794 = vmatprep.subr.mxu0 0.0
        %1795 = vmatpush1.msra.mxu0 0.0
        %1796 = vmatprep.subr.mxu0 0.0
        %1797 = vmatpush1.msra.mxu0 0.0
        %1798 = vmatprep.subr.mxu0 0.0
        %1799 = vmatpush1.msra.mxu0 0.0
        %1800 = vmatprep.subr.mxu0 0.0
        %1801 = vmatpush1.msra.mxu0 0.0
        %1802 = vmatprep.subr.mxu0 0.0
        %1803 = vmatpush1.msra.mxu0 0.0
        %1804 = vmatprep.subr.mxu0 0.0
        %1805 = vmatpush1.msra.mxu0 0.0
        %1806 = vmatprep.subr.mxu0 0.0
        %1807 = vmatpush1.msra.mxu0 0.0
        %1808 = vmatprep.subr.mxu0 0.0
        %1809 = vmatpush1.msra.mxu0 0.0
        %1810 = vmatprep.subr.mxu0 0.0
        %1811 = vmatpush1.msra.mxu0 0.0
        %1812 = vmatprep.subr.mxu0 0.0
        %1813 = vmatpush1.msra.mxu0 0.0
        %1814 = vmatprep.subr.mxu0 0.0
        %1815 = vmatpush1.msra.mxu0 0.0
        %1816 = vmatprep.subr.mxu0 0.0
        %1817 = vmatpush1.msra.mxu0 0.0
        %1818 = vmatprep.subr.mxu0 0.0
        %1819 = vmatpush1.msra.mxu0 0.0
        %1820 = vmatprep.mubr.f32.mxu0 0.0
        %1821 = vmatmul.mubr.f32.gmra.mrb[0].mxu0 %v1754
        %v1822 = vpop.f32.mrb[0].mxu0
        %v1823 = vadd.f32 0.0, %v1822
        %v1824 = vpop.f32.mrb[0].mxu0
        %1825 = vdwg.mxu0
        %v1827 = vsel %vm1401, %v1736, 0
        %1829 = vmatprep.subr.mxu0 0.0
        %1830 = vmatpush1.msra.mxu0 %v1258
        %1831 = vmatprep.subr.mxu0 0.0
        %1832 = vmatpush1.msra.mxu0 0.0
        %1833 = vmatprep.subr.mxu0 0.0
        %1834 = vmatpush1.msra.mxu0 0.0
        %1835 = vmatprep.subr.mxu0 0.0
        %1836 = vmatpush1.msra.mxu0 0.0
        %1837 = vmatprep.subr.mxu0 0.0
        %1838 = vmatpush1.msra.mxu0 0.0
        %1839 = vmatprep.subr.mxu0 0.0
        %1840 = vmatpush1.msra.mxu0 0.0
        %1841 = vmatprep.subr.mxu0 0.0
        %1842 = vmatpush1.msra.mxu0 0.0
        %1843 = vmatprep.subr.mxu0 0.0
        %1844 = vmatpush1.msra.mxu0 0.0
        %1845 = vmatprep.subr.mxu0 0.0
        %1846 = vmatpush1.msra.mxu0 0.0
        %1847 = vmatprep.subr.mxu0 0.0
        %1848 = vmatpush1.msra.mxu0 0.0
        %1849 = vmatprep.subr.mxu0 0.0
        %1850 = vmatpush1.msra.mxu0 0.0
        %1851 = vmatprep.subr.mxu0 0.0
        %1852 = vmatpush1.msra.mxu0 0.0
        %1853 = vmatprep.subr.mxu0 0.0
        %1854 = vmatpush1.msra.mxu0 0.0
        %1855 = vmatprep.subr.mxu0 0.0
        %1856 = vmatpush1.msra.mxu0 0.0
        %1857 = vmatprep.subr.mxu0 0.0
        %1858 = vmatpush1.msra.mxu0 0.0
        %1859 = vmatprep.subr.mxu0 0.0
        %1860 = vmatpush1.msra.mxu0 0.0
        %1861 = vmatprep.subr.mxu0 0.0
        %1862 = vmatpush1.msra.mxu0 0.0
        %1863 = vmatprep.subr.mxu0 0.0
        %1864 = vmatpush1.msra.mxu0 0.0
        %1865 = vmatprep.subr.mxu0 0.0
        %1866 = vmatpush1.msra.mxu0 0.0
        %1867 = vmatprep.subr.mxu0 0.0
        %1868 = vmatpush1.msra.mxu0 0.0
        %1869 = vmatprep.subr.mxu0 0.0
        %1870 = vmatpush1.msra.mxu0 0.0
        %1871 = vmatprep.subr.mxu0 0.0
        %1872 = vmatpush1.msra.mxu0 0.0
        %1873 = vmatprep.subr.mxu0 0.0
        %1874 = vmatpush1.msra.mxu0 0.0
        %1875 = vmatprep.subr.mxu0 0.0
        %1876 = vmatpush1.msra.mxu0 0.0
        %1877 = vmatprep.subr.mxu0 0.0
        %1878 = vmatpush1.msra.mxu0 0.0
        %1879 = vmatprep.subr.mxu0 0.0
        %1880 = vmatpush1.msra.mxu0 0.0
        %1881 = vmatprep.subr.mxu0 0.0
        %1882 = vmatpush1.msra.mxu0 0.0
        %1883 = vmatprep.subr.mxu0 0.0
        %1884 = vmatpush1.msra.mxu0 0.0
        %1885 = vmatprep.subr.mxu0 0.0
        %1886 = vmatpush1.msra.mxu0 0.0
        %1887 = vmatprep.subr.mxu0 0.0
        %1888 = vmatpush1.msra.mxu0 0.0
        %1889 = vmatprep.subr.mxu0 0.0
        %1890 = vmatpush1.msra.mxu0 0.0
        %1891 = vmatprep.subr.mxu0 0.0
        %1892 = vmatpush1.msra.mxu0 0.0
        %1893 = vmatprep.mubr.f32.mxu0 0.0
        %1894 = vmatmul.mubr.f32.gmra.mrb[0].mxu0 %v1827
        %v1895 = vpop.f32.mrb[0].mxu0
        %v1896 = vadd.f32 0.0, %v1895
        %v1897 = vpop.f32.mrb[0].mxu0
        %1898 = vdwg.mxu0
        %v1900 = vsel %vm1401, %v1738, 0
        %1902 = vmatprep.subr.mxu0 0.0
        %1903 = vmatpush1.msra.mxu0 %v1328
        %1904 = vmatprep.subr.mxu0 0.0
        %1905 = vmatpush1.msra.mxu0 0.0
        %1906 = vmatprep.subr.mxu0 0.0
        %1907 = vmatpush1.msra.mxu0 0.0
        %1908 = vmatprep.subr.mxu0 0.0
        %1909 = vmatpush1.msra.mxu0 0.0
        %1910 = vmatprep.subr.mxu0 0.0
        %1911 = vmatpush1.msra.mxu0 0.0
        %1912 = vmatprep.subr.mxu0 0.0
        %1913 = vmatpush1.msra.mxu0 0.0
        %1914 = vmatprep.subr.mxu0 0.0
        %1915 = vmatpush1.msra.mxu0 0.0
        %1916 = vmatprep.subr.mxu0 0.0
        %1917 = vmatpush1.msra.mxu0 0.0
        %1918 = vmatprep.subr.mxu0 0.0
        %1919 = vmatpush1.msra.mxu0 0.0
        %1920 = vmatprep.subr.mxu0 0.0
        %1921 = vmatpush1.msra.mxu0 0.0
        %1922 = vmatprep.subr.mxu0 0.0
        %1923 = vmatpush1.msra.mxu0 0.0
        %1924 = vmatprep.subr.mxu0 0.0
        %1925 = vmatpush1.msra.mxu0 0.0
        %1926 = vmatprep.subr.mxu0 0.0
        %1927 = vmatpush1.msra.mxu0 0.0
        %1928 = vmatprep.subr.mxu0 0.0
        %1929 = vmatpush1.msra.mxu0 0.0
        %1930 = vmatprep.subr.mxu0 0.0
        %1931 = vmatpush1.msra.mxu0 0.0
        %1932 = vmatprep.subr.mxu0 0.0
        %1933 = vmatpush1.msra.mxu0 0.0
        %1934 = vmatprep.subr.mxu0 0.0
        %1935 = vmatpush1.msra.mxu0 0.0
        %1936 = vmatprep.subr.mxu0 0.0
        %1937 = vmatpush1.msra.mxu0 0.0
        %1938 = vmatprep.subr.mxu0 0.0
        %1939 = vmatpush1.msra.mxu0 0.0
        %1940 = vmatprep.subr.mxu0 0.0
        %1941 = vmatpush1.msra.mxu0 0.0
        %1942 = vmatprep.subr.mxu0 0.0
        %1943 = vmatpush1.msra.mxu0 0.0
        %1944 = vmatprep.subr.mxu0 0.0
        %1945 = vmatpush1.msra.mxu0 0.0
        %1946 = vmatprep.subr.mxu0 0.0
        %1947 = vmatpush1.msra.mxu0 0.0
        %1948 = vmatprep.subr.mxu0 0.0
        %1949 = vmatpush1.msra.mxu0 0.0
        %1950 = vmatprep.subr.mxu0 0.0
        %1951 = vmatpush1.msra.mxu0 0.0
        %1952 = vmatprep.subr.mxu0 0.0
        %1953 = vmatpush1.msra.mxu0 0.0
        %1954 = vmatprep.subr.mxu0 0.0
        %1955 = vmatpush1.msra.mxu0 0.0
        %1956 = vmatprep.subr.mxu0 0.0
        %1957 = vmatpush1.msra.mxu0 0.0
        %1958 = vmatprep.subr.mxu0 0.0
        %1959 = vmatpush1.msra.mxu0 0.0
        %1960 = vmatprep.subr.mxu0 0.0
        %1961 = vmatpush1.msra.mxu0 0.0
        %1962 = vmatprep.subr.mxu0 0.0
        %1963 = vmatpush1.msra.mxu0 0.0
        %1964 = vmatprep.subr.mxu0 0.0
        %1965 = vmatpush1.msra.mxu0 0.0
        %1966 = vmatprep.mubr.f32.mxu0 0.0
        %1967 = vmatmul.mubr.f32.gmra.mrb[0].mxu0 %v1900
        %v1968 = vpop.f32.mrb[0].mxu0
        %v1969 = vadd.f32 0.0, %v1968
        %v1970 = vpop.f32.mrb[0].mxu0
        %1971 = vdwg.mxu0
        %v1973 = vsel %vm1401, %v1740, 0
        %1975 = vmatprep.subr.mxu0 0.0
        %1976 = vmatpush1.msra.mxu0 %v1398
        %1977 = vmatprep.subr.mxu0 0.0
        %1978 = vmatpush1.msra.mxu0 0.0
        %1979 = vmatprep.subr.mxu0 0.0
        %1980 = vmatpush1.msra.mxu0 0.0
        %1981 = vmatprep.subr.mxu0 0.0
        %1982 = vmatpush1.msra.mxu0 0.0
        %1983 = vmatprep.subr.mxu0 0.0
        %1984 = vmatpush1.msra.mxu0 0.0
        %1985 = vmatprep.subr.mxu0 0.0
        %1986 = vmatpush1.msra.mxu0 0.0
        %1987 = vmatprep.subr.mxu0 0.0
        %1988 = vmatpush1.msra.mxu0 0.0
        %1989 = vmatprep.subr.mxu0 0.0
        %1990 = vmatpush1.msra.mxu0 0.0
        %1991 = vmatprep.subr.mxu0 0.0
        %1992 = vmatpush1.msra.mxu0 0.0
        %1993 = vmatprep.subr.mxu0 0.0
        %1994 = vmatpush1.msra.mxu0 0.0
        %1995 = vmatprep.subr.mxu0 0.0
        %1996 = vmatpush1.msra.mxu0 0.0
        %1997 = vmatprep.subr.mxu0 0.0
        %1998 = vmatpush1.msra.mxu0 0.0
        %1999 = vmatprep.subr.mxu0 0.0
        %2000 = vmatpush1.msra.mxu0 0.0
        %2001 = vmatprep.subr.mxu0 0.0
        %2002 = vmatpush1.msra.mxu0 0.0
        %2003 = vmatprep.subr.mxu0 0.0
        %2004 = vmatpush1.msra.mxu0 0.0
        %2005 = vmatprep.subr.mxu0 0.0
        %2006 = vmatpush1.msra.mxu0 0.0
        %2007 = vmatprep.subr.mxu0 0.0
        %2008 = vmatpush1.msra.mxu0 0.0
        %2009 = vmatprep.subr.mxu0 0.0
        %2010 = vmatpush1.msra.mxu0 0.0
        %2011 = vmatprep.subr.mxu0 0.0
        %2012 = vmatpush1.msra.mxu0 0.0
        %2013 = vmatprep.subr.mxu0 0.0
        %2014 = vmatpush1.msra.mxu0 0.0
        %2015 = vmatprep.subr.mxu0 0.0
        %2016 = vmatpush1.msra.mxu0 0.0
        %2017 = vmatprep.subr.mxu0 0.0
        %2018 = vmatpush1.msra.mxu0 0.0
        %2019 = vmatprep.subr.mxu0 0.0
        %2020 = vmatpush1.msra.mxu0 0.0
        %2021 = vmatprep.subr.mxu0 0.0
        %2022 = vmatpush1.msra.mxu0 0.0
        %2023 = vmatprep.subr.mxu0 0.0
        %2024 = vmatpush1.msra.mxu0 0.0
        %2025 = vmatprep.subr.mxu0 0.0
        %2026 = vmatpush1.msra.mxu0 0.0
        %2027 = vmatprep.subr.mxu0 0.0
        %2028 = vmatpush1.msra.mxu0 0.0
        %2029 = vmatprep.subr.mxu0 0.0
        %2030 = vmatpush1.msra.mxu0 0.0
        %2031 = vmatprep.subr.mxu0 0.0
        %2032 = vmatpush1.msra.mxu0 0.0
        %2033 = vmatprep.subr.mxu0 0.0
        %2034 = vmatpush1.msra.mxu0 0.0
        %2035 = vmatprep.subr.mxu0 0.0
        %2036 = vmatpush1.msra.mxu0 0.0
        %2037 = vmatprep.subr.mxu0 0.0
        %2038 = vmatpush1.msra.mxu0 0.0
        %2039 = vmatprep.mubr.f32.mxu0 0.0
        %2040 = vmatmul.mubr.f32.gmra.mrb[0].mxu0 %v1973
        %v2041 = vpop.f32.mrb[0].mxu0
        %v2042 = vadd.f32 0.0, %v2041
        %v2043 = vpop.f32.mrb[0].mxu0
        %2044 = vdwg.mxu0
        %v2045 = vrcp.pop %v1743
        %v2046 = vrcp.pop %v1746
        %v2047 = vrcp.pop %v1749
        %v2048 = vrcp.pop %v1752
        %v2049 = vmul.f32 %v1823, %v2045
        %v2050 = vmul.f32 %v1896, %v2046
        %v2051 = vmul.f32 %v1969, %v2047
        %v2052 = vmul.f32 %v2042, %v2048
        %v2053 = vld [vmem:[%s9] sm:$0xff]
        %v2054 = vld [vmem:[%s9 + $0x8] sm:$0xff]
        %v2055 = vld [vmem:[%s9 + $0x10] sm:$0xff]
        %v2056 = vld [vmem:[%s9 + $0x18] sm:$0xff]
        %v2058 = vsel %vm1401, %v2049, 0
        %2060 = vmatprep.subr.mxu0 0.0
        %2061 = vmatpush1.msra.mxu0 %v2053
        %2062 = vmatprep.subr.mxu0 0.0
        %2063 = vmatpush1.msra.mxu0 0.0
        %2064 = vmatprep.subr.mxu0 0.0
        %2065 = vmatpush1.msra.mxu0 0.0
        %2066 = vmatprep.subr.mxu0 0.0
        %2067 = vmatpush1.msra.mxu0 0.0
        %2068 = vmatprep.subr.mxu0 0.0
        %2069 = vmatpush1.msra.mxu0 0.0
        %2070 = vmatprep.subr.mxu0 0.0
        %2071 = vmatpush1.msra.mxu0 0.0
        %2072 = vmatprep.subr.mxu0 0.0
        %2073 = vmatpush1.msra.mxu0 0.0
        %2074 = vmatprep.subr.mxu0 0.0
        %2075 = vmatpush1.msra.mxu0 0.0
        %2076 = vmatprep.subr.mxu0 0.0
        %2077 = vmatpush1.msra.mxu0 0.0
        %2078 = vmatprep.subr.mxu0 0.0
        %2079 = vmatpush1.msra.mxu0 0.0
        %2080 = vmatprep.subr.mxu0 0.0
        %2081 = vmatpush1.msra.mxu0 0.0
        %2082 = vmatprep.subr.mxu0 0.0
        %2083 = vmatpush1.msra.mxu0 0.0
        %2084 = vmatprep.subr.mxu0 0.0
        %2085 = vmatpush1.msra.mxu0 0.0
        %2086 = vmatprep.subr.mxu0 0.0
        %2087 = vmatpush1.msra.mxu0 0.0
        %2088 = vmatprep.subr.mxu0 0.0
        %2089 = vmatpush1.msra.mxu0 0.0
        %2090 = vmatprep.subr.mxu0 0.0
        %2091 = vmatpush1.msra.mxu0 0.0
        %2092 = vmatprep.subr.mxu0 0.0
        %2093 = vmatpush1.msra.mxu0 0.0
        %2094 = vmatprep.subr.mxu0 0.0
        %2095 = vmatpush1.msra.mxu0 0.0
        %2096 = vmatprep.subr.mxu0 0.0
        %2097 = vmatpush1.msra.mxu0 0.0
        %2098 = vmatprep.subr.mxu0 0.0
        %2099 = vmatpush1.msra.mxu0 0.0
        %2100 = vmatprep.subr.mxu0 0.0
        %2101 = vmatpush1.msra.mxu0 0.0
        %2102 = vmatprep.subr.mxu0 0.0
        %2103 = vmatpush1.msra.mxu0 0.0
        %2104 = vmatprep.subr.mxu0 0.0
        %2105 = vmatpush1.msra.mxu0 0.0
        %2106 = vmatprep.subr.mxu0 0.0
        %2107 = vmatpush1.msra.mxu0 0.0
        %2108 = vmatprep.subr.mxu0 0.0
        %2109 = vmatpush1.msra.mxu0 0.0
        %2110 = vmatprep.subr.mxu0 0.0
        %2111 = vmatpush1.msra.mxu0 0.0
        %2112 = vmatprep.subr.mxu0 0.0
        %2113 = vmatpush1.msra.mxu0 0.0
        %2114 = vmatprep.subr.mxu0 0.0
        %2115 = vmatpush1.msra.mxu0 0.0
        %2116 = vmatprep.subr.mxu0 0.0
        %2117 = vmatpush1.msra.mxu0 0.0
        %2118 = vmatprep.subr.mxu0 0.0
        %2119 = vmatpush1.msra.mxu0 0.0
        %2120 = vmatprep.subr.mxu0 0.0
        %2121 = vmatpush1.msra.mxu0 0.0
        %2122 = vmatprep.subr.mxu0 0.0
        %2123 = vmatpush1.msra.mxu0 0.0
        %2124 = vmatprep.mubr.f32.mxu0 0.0
        %2125 = vmatmul.mubr.f32.gmra.mrb[0].mxu0 %v2058
        %v2126 = vpop.f32.mrb[0].mxu0
        %v2127 = vadd.f32 0.0, %v2126
        %v2128 = vpop.f32.mrb[0].mxu0
        %2129 = vdwg.mxu0
        %v2131 = vsel %vm1401, %v2050, 0
        %2133 = vmatprep.subr.mxu0 0.0
        %2134 = vmatpush1.msra.mxu0 %v2054
        %2135 = vmatprep.subr.mxu0 0.0
        %2136 = vmatpush1.msra.mxu0 0.0
        %2137 = vmatprep.subr.mxu0 0.0
        %2138 = vmatpush1.msra.mxu0 0.0
        %2139 = vmatprep.subr.mxu0 0.0
        %2140 = vmatpush1.msra.mxu0 0.0
        %2141 = vmatprep.subr.mxu0 0.0
        %2142 = vmatpush1.msra.mxu0 0.0
        %2143 = vmatprep.subr.mxu0 0.0
        %2144 = vmatpush1.msra.mxu0 0.0
        %2145 = vmatprep.subr.mxu0 0.0
        %2146 = vmatpush1.msra.mxu0 0.0
        %2147 = vmatprep.subr.mxu0 0.0
        %2148 = vmatpush1.msra.mxu0 0.0
        %2149 = vmatprep.subr.mxu0 0.0
        %2150 = vmatpush1.msra.mxu0 0.0
        %2151 = vmatprep.subr.mxu0 0.0
        %2152 = vmatpush1.msra.mxu0 0.0
        %2153 = vmatprep.subr.mxu0 0.0
        %2154 = vmatpush1.msra.mxu0 0.0
        %2155 = vmatprep.subr.mxu0 0.0
        %2156 = vmatpush1.msra.mxu0 0.0
        %2157 = vmatprep.subr.mxu0 0.0
        %2158 = vmatpush1.msra.mxu0 0.0
        %2159 = vmatprep.subr.mxu0 0.0
        %2160 = vmatpush1.msra.mxu0 0.0
        %2161 = vmatprep.subr.mxu0 0.0
        %2162 = vmatpush1.msra.mxu0 0.0
        %2163 = vmatprep.subr.mxu0 0.0
        %2164 = vmatpush1.msra.mxu0 0.0
        %2165 = vmatprep.subr.mxu0 0.0
        %2166 = vmatpush1.msra.mxu0 0.0
        %2167 = vmatprep.subr.mxu0 0.0
        %2168 = vmatpush1.msra.mxu0 0.0
        %2169 = vmatprep.subr.mxu0 0.0
        %2170 = vmatpush1.msra.mxu0 0.0
        %2171 = vmatprep.subr.mxu0 0.0
        %2172 = vmatpush1.msra.mxu0 0.0
        %2173 = vmatprep.subr.mxu0 0.0
        %2174 = vmatpush1.msra.mxu0 0.0
        %2175 = vmatprep.subr.mxu0 0.0
        %2176 = vmatpush1.msra.mxu0 0.0
        %2177 = vmatprep.subr.mxu0 0.0
        %2178 = vmatpush1.msra.mxu0 0.0
        %2179 = vmatprep.subr.mxu0 0.0
        %2180 = vmatpush1.msra.mxu0 0.0
        %2181 = vmatprep.subr.mxu0 0.0
        %2182 = vmatpush1.msra.mxu0 0.0
        %2183 = vmatprep.subr.mxu0 0.0
        %2184 = vmatpush1.msra.mxu0 0.0
        %2185 = vmatprep.subr.mxu0 0.0
        %2186 = vmatpush1.msra.mxu0 0.0
        %2187 = vmatprep.subr.mxu0 0.0
        %2188 = vmatpush1.msra.mxu0 0.0
        %2189 = vmatprep.subr.mxu0 0.0
        %2190 = vmatpush1.msra.mxu0 0.0
        %2191 = vmatprep.subr.mxu0 0.0
        %2192 = vmatpush1.msra.mxu0 0.0
        %2193 = vmatprep.subr.mxu0 0.0
        %2194 = vmatpush1.msra.mxu0 0.0
        %2195 = vmatprep.subr.mxu0 0.0
        %2196 = vmatpush1.msra.mxu0 0.0
        %2197 = vmatprep.mubr.f32.mxu0 0.0
        %2198 = vmatmul.mubr.f32.gmra.mrb[0].mxu0 %v2131
        %v2199 = vpop.f32.mrb[0].mxu0
        %v2200 = vadd.f32 0.0, %v2199
        %v2201 = vpop.f32.mrb[0].mxu0
        %2202 = vdwg.mxu0
        %v2204 = vsel %vm1401, %v2051, 0
        %2206 = vmatprep.subr.mxu0 0.0
        %2207 = vmatpush1.msra.mxu0 %v2055
        %2208 = vmatprep.subr.mxu0 0.0
        %2209 = vmatpush1.msra.mxu0 0.0
        %2210 = vmatprep.subr.mxu0 0.0
        %2211 = vmatpush1.msra.mxu0 0.0
        %2212 = vmatprep.subr.mxu0 0.0
        %2213 = vmatpush1.msra.mxu0 0.0
        %2214 = vmatprep.subr.mxu0 0.0
        %2215 = vmatpush1.msra.mxu0 0.0
        %2216 = vmatprep.subr.mxu0 0.0
        %2217 = vmatpush1.msra.mxu0 0.0
        %2218 = vmatprep.subr.mxu0 0.0
        %2219 = vmatpush1.msra.mxu0 0.0
        %2220 = vmatprep.subr.mxu0 0.0
        %2221 = vmatpush1.msra.mxu0 0.0
        %2222 = vmatprep.subr.mxu0 0.0
        %2223 = vmatpush1.msra.mxu0 0.0
        %2224 = vmatprep.subr.mxu0 0.0
        %2225 = vmatpush1.msra.mxu0 0.0
        %2226 = vmatprep.subr.mxu0 0.0
        %2227 = vmatpush1.msra.mxu0 0.0
        %2228 = vmatprep.subr.mxu0 0.0
        %2229 = vmatpush1.msra.mxu0 0.0
        %2230 = vmatprep.subr.mxu0 0.0
        %2231 = vmatpush1.msra.mxu0 0.0
        %2232 = vmatprep.subr.mxu0 0.0
        %2233 = vmatpush1.msra.mxu0 0.0
        %2234 = vmatprep.subr.mxu0 0.0
        %2235 = vmatpush1.msra.mxu0 0.0
        %2236 = vmatprep.subr.mxu0 0.0
        %2237 = vmatpush1.msra.mxu0 0.0
        %2238 = vmatprep.subr.mxu0 0.0
        %2239 = vmatpush1.msra.mxu0 0.0
        %2240 = vmatprep.subr.mxu0 0.0
        %2241 = vmatpush1.msra.mxu0 0.0
        %2242 = vmatprep.subr.mxu0 0.0
        %2243 = vmatpush1.msra.mxu0 0.0
        %2244 = vmatprep.subr.mxu0 0.0
        %2245 = vmatpush1.msra.mxu0 0.0
        %2246 = vmatprep.subr.mxu0 0.0
        %2247 = vmatpush1.msra.mxu0 0.0
        %2248 = vmatprep.subr.mxu0 0.0
        %2249 = vmatpush1.msra.mxu0 0.0
        %2250 = vmatprep.subr.mxu0 0.0
        %2251 = vmatpush1.msra.mxu0 0.0
        %2252 = vmatprep.subr.mxu0 0.0
        %2253 = vmatpush1.msra.mxu0 0.0
        %2254 = vmatprep.subr.mxu0 0.0
        %2255 = vmatpush1.msra.mxu0 0.0
        %2256 = vmatprep.subr.mxu0 0.0
        %2257 = vmatpush1.msra.mxu0 0.0
        %2258 = vmatprep.subr.mxu0 0.0
        %2259 = vmatpush1.msra.mxu0 0.0
        %2260 = vmatprep.subr.mxu0 0.0
        %2261 = vmatpush1.msra.mxu0 0.0
        %2262 = vmatprep.subr.mxu0 0.0
        %2263 = vmatpush1.msra.mxu0 0.0
        %2264 = vmatprep.subr.mxu0 0.0
        %2265 = vmatpush1.msra.mxu0 0.0
        %2266 = vmatprep.subr.mxu0 0.0
        %2267 = vmatpush1.msra.mxu0 0.0
        %2268 = vmatprep.subr.mxu0 0.0
        %2269 = vmatpush1.msra.mxu0 0.0
        %2270 = vmatprep.mubr.f32.mxu0 0.0
        %2271 = vmatmul.mubr.f32.gmra.mrb[0].mxu0 %v2204
        %v2272 = vpop.f32.mrb[0].mxu0
        %v2273 = vadd.f32 0.0, %v2272
        %v2274 = vpop.f32.mrb[0].mxu0
        %2275 = vdwg.mxu0
        %v2277 = vsel %vm1401, %v2052, 0
        %2279 = vmatprep.subr.mxu0 0.0
        %2280 = vmatpush1.msra.mxu0 %v2056
        %2281 = vmatprep.subr.mxu0 0.0
        %2282 = vmatpush1.msra.mxu0 0.0
        %2283 = vmatprep.subr.mxu0 0.0
        %2284 = vmatpush1.msra.mxu0 0.0
        %2285 = vmatprep.subr.mxu0 0.0
        %2286 = vmatpush1.msra.mxu0 0.0
        %2287 = vmatprep.subr.mxu0 0.0
        %2288 = vmatpush1.msra.mxu0 0.0
        %2289 = vmatprep.subr.mxu0 0.0
        %2290 = vmatpush1.msra.mxu0 0.0
        %2291 = vmatprep.subr.mxu0 0.0
        %2292 = vmatpush1.msra.mxu0 0.0
        %2293 = vmatprep.subr.mxu0 0.0
        %2294 = vmatpush1.msra.mxu0 0.0
        %2295 = vmatprep.subr.mxu0 0.0
        %2296 = vmatpush1.msra.mxu0 0.0
        %2297 = vmatprep.subr.mxu0 0.0
        %2298 = vmatpush1.msra.mxu0 0.0
        %2299 = vmatprep.subr.mxu0 0.0
        %2300 = vmatpush1.msra.mxu0 0.0
        %2301 = vmatprep.subr.mxu0 0.0
        %2302 = vmatpush1.msra.mxu0 0.0
        %2303 = vmatprep.subr.mxu0 0.0
        %2304 = vmatpush1.msra.mxu0 0.0
        %2305 = vmatprep.subr.mxu0 0.0
        %2306 = vmatpush1.msra.mxu0 0.0
        %2307 = vmatprep.subr.mxu0 0.0
        %2308 = vmatpush1.msra.mxu0 0.0
        %2309 = vmatprep.subr.mxu0 0.0
        %2310 = vmatpush1.msra.mxu0 0.0
        %2311 = vmatprep.subr.mxu0 0.0
        %2312 = vmatpush1.msra.mxu0 0.0
        %2313 = vmatprep.subr.mxu0 0.0
        %2314 = vmatpush1.msra.mxu0 0.0
        %2315 = vmatprep.subr.mxu0 0.0
        %2316 = vmatpush1.msra.mxu0 0.0
        %2317 = vmatprep.subr.mxu0 0.0
        %2318 = vmatpush1.msra.mxu0 0.0
        %2319 = vmatprep.subr.mxu0 0.0
        %2320 = vmatpush1.msra.mxu0 0.0
        %2321 = vmatprep.subr.mxu0 0.0
        %2322 = vmatpush1.msra.mxu0 0.0
        %2323 = vmatprep.subr.mxu0 0.0
        %2324 = vmatpush1.msra.mxu0 0.0
        %2325 = vmatprep.subr.mxu0 0.0
        %2326 = vmatpush1.msra.mxu0 0.0
        %2327 = vmatprep.subr.mxu0 0.0
        %2328 = vmatpush1.msra.mxu0 0.0
        %2329 = vmatprep.subr.mxu0 0.0
        %2330 = vmatpush1.msra.mxu0 0.0
        %2331 = vmatprep.subr.mxu0 0.0
        %2332 = vmatpush1.msra.mxu0 0.0
        %2333 = vmatprep.subr.mxu0 0.0
        %2334 = vmatpush1.msra.mxu0 0.0
        %2335 = vmatprep.subr.mxu0 0.0
        %2336 = vmatpush1.msra.mxu0 0.0
        %2337 = vmatprep.subr.mxu0 0.0
        %2338 = vmatpush1.msra.mxu0 0.0
        %2339 = vmatprep.subr.mxu0 0.0
        %2340 = vmatpush1.msra.mxu0 0.0
        %2341 = vmatprep.subr.mxu0 0.0
        %2342 = vmatpush1.msra.mxu0 0.0
        %2343 = vmatprep.mubr.f32.mxu0 0.0
        %2344 = vmatmul.mubr.f32.gmra.mrb[0].mxu0 %v2277
        %v2345 = vpop.f32.mrb[0].mxu0
        %v2346 = vadd.f32 0.0, %v2345
        %v2347 = vpop.f32.mrb[0].mxu0
        %2348 = vdwg.mxu0
        %v2349 = vsel %vm463, %v2127, 0.0
        %v2350 = vsel %vm463, %v2200, 0.0
        %v2351 = vadd.f32 %v2349, %v2350
        %v2352 = vsel %vm463, %v2273, 0.0
        %v2353 = vadd.f32 %v2351, %v2352
        %v2354 = vsel %vm463, %v2346, 0.0
        %v2355 = vadd.f32 %v2353, %v2354
        %v2356 = vld [vmem:[%s10] sm:$0x1]
        %v2358 = vlaneseq
        %v2359 = vshrl.u32 %v2358, 7
        %v2360 = vsub.s32 0, %v2359
        %v2361 = vrot.slane %v2356, %v2360
        %v2363 = vadd.f32 %v2355, %v2361
        %2364 = vst.msk [vmem:[%s403] sm:$0xff] %vm463, %v2363
        %s2365 = sand.u32 %s279, 1
        %s2366 = scalar_lea.sflag [#allocation3], %s2365
        %s2367 = sand.u32 %s279, 1
        %s2368 = smul.addr %s2367, 8
        %s2369 = scalar_lea.vmem [#allocation2], %s2368
        // Predicated region
        $region65: #{tpu_custom_call.1} parent=63 // pred_check
          %p2370 = pneg %p289
        $region66: #{tpu_custom_call.1} parent=63 // pred_check_branch
          %2372 = sbr.rel (%p2370) target = $region68
        $region67: #{tpu_custom_call.1} parent=63 // pred_region
          %s2374 = ssub.s32 128, 128
          %2375 = vsyncadd %s2366, %s2374
          %s2376 = smul.addr %s25, 128
          %s2377 = scalar_lea.hbm %s11, %s2376
          %s2379 = sshll.u32 %s2369, 4
          %s2380 = int_to_ptr.vmem [resolvable:$true] %s2379
          %2382 = dma.vmem_to_hbm [thread:$0]  %s2380, 128, %s2377, %s2366
        $region68: #{tpu_custom_call.1} parent=63 // pred_fallthru
          _
      $region64: #{tpu_custom_call.1} parent=5 // pred_fallthru
        _
      %p2383 = scmp.le.s32.totalorder 2, %s20
      // Predicated region
      $region69: #{tpu_custom_call.1} parent=5 // pred_check
        %p2384 = pneg %p2383
      $region70: #{tpu_custom_call.1} parent=5 // pred_check_branch
        %2386 = sbr.rel (%p2384) target = $region72
      $region71: #{tpu_custom_call.1} parent=5 // pred_region
        %s2387 = ssub.s32 %s20, 2
        // Predicated region
        $region73: #{tpu_custom_call.1} parent=71 // pred_check
          %p2388 = pneg %p295
        $region74: #{tpu_custom_call.1} parent=71 // pred_check_branch
          %2390 = sbr.rel (%p2388) target = $region76
        $region75: #{tpu_custom_call.1} parent=71 // pred_region
          %s2391 = sand.u32 %s280, 1
          %s2392 = scalar_lea.sflag [#allocation3], %s2391
          %s2393 = sand.u32 %s280, 1
          %s2394 = smul.addr %s2393, 8
          %s2395 = scalar_lea.vmem [#allocation2], %s2394
          %2396 = dma.done %s2392, 128
        $region76: #{tpu_custom_call.1} parent=71 // pred_fallthru
          _
      $region72: #{tpu_custom_call.1} parent=5 // pred_fallthru
        _
    $region6: #{tpu_custom_call.1} parent=1 // loop_footer
      %s24 = sadd.s32 1, %s20
    $region7: #{tpu_custom_call.1} parent=1 // loop_footer_branch
      %19 = sbr.rel target = $region3
    $region8: #{tpu_custom_call.1} parent=1 // loop_exit
      _
    %2397 = vsyncpa [#allocation3], 1
    %s2398 = scalar_lea.sflag [#allocation3], 1
    %2399 = vsyncpa %s2398, 1

</llo_original>
